<compile_context>
chip_gen: v7x
topology: tpu7x:2x2x1
jax: 0.10.0
libtpu: 0.0.40
codegen_flags: <defaults>
</compile_context>

<pallas_src>
import functools

import jax
import jax.numpy as jnp
from jax.experimental import pallas as pl
from jax.experimental.pallas import tpu as pltpu

_K_PAD = 8      # input features padded 4 -> 8 (zero columns; math unchanged)
_N4_PAD = 128   # layer-4 weight padded 4 -> 128 lanes for the MXU; output itself is NOT padded


def _mlp_kernel(x_ref,
                w1_ref, b1_ref,
                w2_ref, b2_ref,
                w3_ref, b3_ref,
                w4_ref, b4_ref,
                o_ref):
    x = x_ref[...]                                                     # (bm, 8) f32

    # layer 1 (tiny FLOPs): f32 MXU inputs, f32 accumulation
    h1 = jnp.dot(x, w1_ref[...], preferred_element_type=jnp.float32) + b1_ref[...]
    h1 = jnp.maximum(h1, 0.0).astype(jnp.bfloat16)                     # (bm, 256) bf16

    # layers 2/3 carry >99% of the FLOPs: bf16 MXU inputs, f32 accumulation.
    # bias+ReLU fused then re-stored as bf16 so only one (bm, 1024) temp stays live.
    h2 = jnp.dot(h1, w2_ref[...], preferred_element_type=jnp.float32) + b2_ref[...]
    h2 = jnp.maximum(h2, 0.0).astype(jnp.bfloat16)                     # (bm, 1024) bf16

    h3 = jnp.dot(h2, w3_ref[...], preferred_element_type=jnp.float32) + b3_ref[...]
    h3 = jnp.maximum(h3, 0.0).astype(jnp.bfloat16)                     # (bm, 256) bf16

    # layer 4 (tiny FLOPs): bf16 MXU, 128-lane padded weight for the matmul only;
    # bias/ReLU and the store happen on the 4 real lanes -> no padded HBM writeback.
    h4 = jnp.dot(h3, w4_ref[...], preferred_element_type=jnp.float32)  # (bm, 128) f32
    y = jnp.maximum(h4[:, :4] + b4_ref[...], 0.0)                      # (bm, 4) f32
    o_ref[...] = y.astype(o_ref.dtype)


def prepare_params(params):
    """Pad / cast raw f32 params into the kernel's layout (do once, outside the hot loop)."""
    w1 = jnp.pad(params["w1"].astype(jnp.float32),
                 ((0, _K_PAD - params["w1"].shape[0]), (0, 0)))                     # (8, 256)   f32
    w2 = params["w2"].astype(jnp.bfloat16)                                          # (256,1024) bf16
    w3 = params["w3"].astype(jnp.bfloat16)                                          # (1024,256) bf16
    w4 = jnp.pad(params["w4"],
                 ((0, 0), (0, _N4_PAD - params["w4"].shape[1]))).astype(jnp.bfloat16)  # (256,128) bf16
    return dict(w1=w1, b1=params["b1"], w2=w2, b2=params["b2"],
                w3=w3, b3=params["b3"], w4=w4, b4=params["b4"])


def _round_up(n, m):
    return ((n + m - 1) // m) * m


@functools.partial(jax.jit, static_argnames=("block_rows",))
def easy_unet_generator(x, prepared, *, block_rows=2048):
    """x: [B, 4] float32.  prepared: output of prepare_params.  Returns [B, 4] float32."""
    B, Din = x.shape
    assert Din == 4

    # Batch-adaptive row tile (B is a static shape, so this is plain Python at trace time):
    #   >=4 grid steps when possible, capped at block_rows, never padding a tiny batch wide.
    bm = max(8, min(block_rows, _round_up(-(-B // 4), 8)))
    B_pad = _round_up(B, bm)

    x_p = jnp.pad(x.astype(jnp.float32), ((0, B_pad - B), (0, _K_PAD - Din)))

    w1, b1 = prepared["w1"], prepared["b1"]
    w2, b2 = prepared["w2"], prepared["b2"]
    w3, b3 = prepared["w3"], prepared["b3"]
    w4, b4 = prepared["w4"], prepared["b4"]

    grid = (B_pad // bm,)

    # Weights/biases (~1.1 MiB total) have constant index_maps -> DMA'd once, VMEM-resident;
    # only activation rows are tiled across the grid.
    def full(arr):
        return pl.BlockSpec(arr.shape, lambda i: (0, 0))

    out = pl.pallas_call(
        _mlp_kernel,
        out_shape=jax.ShapeDtypeStruct((B_pad, 4), jnp.float32),
        grid_spec=pltpu.PrefetchScalarGridSpec(
            num_scalar_prefetch=0,
            grid=grid,
            in_specs=[
                pl.BlockSpec((bm, _K_PAD), lambda i: (i, 0)),   # x tile
                full(w1), full(b1),
                full(w2), full(b2),
                full(w3), full(b3),
                full(w4), full(b4),
            ],
            out_specs=pl.BlockSpec((bm, 4), lambda i: (i, 0)),  # unpadded output tile
        ),
        compiler_params=pltpu.CompilerParams(
            dimension_semantics=("parallel",),   # row tiles shard across v7x's two TCs
            vmem_limit_bytes=48 * 1024 * 1024,
        ),
    )(x_p, w1, b1, w2, b2, w3, b3, w4, b4)

    if B_pad != B:
        out = out[:B]
    return out


def init_params(key):
    """Deterministic init mirroring torch.nn.Linear default (U(-1/sqrt(fan_in), +1/sqrt(fan_in)))."""
    dims = [(4, 256), (256, 1024), (1024, 256), (256, 4)]
    params = {}
    for idx, (fan_in, fan_out) in enumerate(dims, start=1):
        key, kw, kb = jax.random.split(key, 3)
        bound = 1.0 / (fan_in ** 0.5)
        params[f"w{idx}"] = jax.random.uniform(
            kw, (fan_in, fan_out), jnp.float32, minval=-bound, maxval=bound)
        # biases kept 2D [1, fan_out] so they broadcast cleanly inside the kernel
        params[f"b{idx}"] = jax.random.uniform(
            kb, (1, fan_out), jnp.float32, minval=-bound, maxval=bound)
    return params


def reference_forward(x, params):
    h = x
    for i in range(1, 5):
        h = jnp.maximum(h @ params[f"w{i}"] + params[f"b{i}"], 0.0)
    return h


if __name__ == "__main__":
    key = jax.random.PRNGKey(0)
    kx, kp = jax.random.split(key)

    params = init_params(kp)
    prepared = prepare_params(params)

    # Small batch, as implied by the module's [B, 4] input.
    B = 2
    x = jax.random.normal(kx, (B, 4), jnp.float32)
    out = jax.block_until_ready(easy_unet_generator(x, prepared))
    ref = reference_forward(x, params)
    assert out.shape == (B, 4)
    assert jnp.allclose(out, ref, atol=2e-2, rtol=2e-2), \
        "mismatch vs pure-JAX reference (small batch)"

    # Larger, non-multiple batch exercises the multi-step grid, row padding and
    # the batch-adaptive tile selection (bm=256 -> 4 grid steps).
    B2 = 1000
    x2 = jax.random.normal(jax.random.PRNGKey(1), (B2, 4), jnp.float32)
    out2 = jax.block_until_ready(easy_unet_generator(x2, prepared))
    ref2 = reference_forward(x2, params)
    assert out2.shape == (B2, 4)
    assert jnp.allclose(out2, ref2, atol=2e-2, rtol=2e-2), \
        "mismatch vs pure-JAX reference (large batch)"

    print("KERNEL_OK")
</pallas_src>

<mosaic_0001>
module attributes {stable_mosaic.version = 11 : i64} {
  func.func @_mlp_kernel(%arg0: i32, %arg1: memref<8x8xf32, #tpu.memory_space<vmem>>, %arg2: memref<8x256xf32, #tpu.memory_space<vmem>>, %arg3: memref<1x256xf32, #tpu.memory_space<vmem>>, %arg4: memref<256x1024xbf16, #tpu.memory_space<vmem>>, %arg5: memref<1x1024xf32, #tpu.memory_space<vmem>>, %arg6: memref<1024x256xbf16, #tpu.memory_space<vmem>>, %arg7: memref<1x256xf32, #tpu.memory_space<vmem>>, %arg8: memref<256x128xbf16, #tpu.memory_space<vmem>>, %arg9: memref<1x4xf32, #tpu.memory_space<vmem>>, %arg10: memref<8x4xf32, #tpu.memory_space<vmem>>) attributes {dimension_semantics = [#tpu.dimension_semantics<parallel>], iteration_bounds = array<i64: 1>, scalar_prefetch = 0 : i64, scratch_operands = 0 : i64, tpu.core_type = #tpu.core_type<tc>, window_params = [{transform_indices = @transform_0, window_bounds = array<i64: 8, 8>}, {pipeline_mode = #tpu.pipeline_mode<synchronous>, transform_indices = @transform_1, window_bounds = array<i64: 8, 256>}, {pipeline_mode = #tpu.pipeline_mode<synchronous>, transform_indices = @transform_2, window_bounds = array<i64: 1, 256>}, {pipeline_mode = #tpu.pipeline_mode<synchronous>, transform_indices = @transform_3, window_bounds = array<i64: 256, 1024>}, {pipeline_mode = #tpu.pipeline_mode<synchronous>, transform_indices = @transform_4, window_bounds = array<i64: 1, 1024>}, {pipeline_mode = #tpu.pipeline_mode<synchronous>, transform_indices = @transform_5, window_bounds = array<i64: 1024, 256>}, {pipeline_mode = #tpu.pipeline_mode<synchronous>, transform_indices = @transform_6, window_bounds = array<i64: 1, 256>}, {pipeline_mode = #tpu.pipeline_mode<synchronous>, transform_indices = @transform_7, window_bounds = array<i64: 256, 128>}, {pipeline_mode = #tpu.pipeline_mode<synchronous>, transform_indices = @transform_8, window_bounds = array<i64: 1, 4>}, {transform_indices = @transform_9, window_bounds = array<i64: 8, 4>}]} {
    %c0 = arith.constant 0 : index
    %c0_0 = arith.constant 0 : index
    %0 = vector.load %arg1[%c0, %c0_0] : memref<8x8xf32, #tpu.memory_space<vmem>>, vector<8x8xf32>
    %c0_1 = arith.constant 0 : index
    %c0_2 = arith.constant 0 : index
    %1 = vector.load %arg2[%c0_1, %c0_2] : memref<8x256xf32, #tpu.memory_space<vmem>>, vector<8x256xf32>
    %cst = arith.constant dense<0.000000e+00> : vector<8x256xf32>
    %2 = tpu.matmul %0, %1, %cst {dimension_numbers = #tpu.dot_dimension_numbers<[1], [0], [0], [1], [0, 0, 1, 1], [], []>} : vector<8x8xf32>, vector<8x256xf32>, vector<8x256xf32> -> vector<8x256xf32>
    %c0_3 = arith.constant 0 : index
    %c0_4 = arith.constant 0 : index
    %3 = vector.load %arg3[%c0_3, %c0_4] : memref<1x256xf32, #tpu.memory_space<vmem>>, vector<1x256xf32>
    %4 = vector.broadcast %3 : vector<1x256xf32> to vector<8x256xf32>
    %5 = arith.addf %2, %4 : vector<8x256xf32>
    %cst_5 = arith.constant 0.000000e+00 : f32
    %6 = vector.broadcast %cst_5 : f32 to vector<8x256xf32>
    %7 = arith.maximumf %5, %6 : vector<8x256xf32>
    %8 = arith.truncf %7 : vector<8x256xf32> to vector<8x256xbf16>
    %c0_6 = arith.constant 0 : index
    %c0_7 = arith.constant 0 : index
    %9 = vector.load %arg4[%c0_6, %c0_7] : memref<256x1024xbf16, #tpu.memory_space<vmem>>, vector<256x1024xbf16>
    %cst_8 = arith.constant dense<0.000000e+00> : vector<8x1024xf32>
    %10 = tpu.matmul %8, %9, %cst_8 {dimension_numbers = #tpu.dot_dimension_numbers<[1], [0], [0], [1], [0, 0, 1, 1], [], []>} : vector<8x256xbf16>, vector<256x1024xbf16>, vector<8x1024xf32> -> vector<8x1024xf32>
    %c0_9 = arith.constant 0 : index
    %c0_10 = arith.constant 0 : index
    %11 = vector.load %arg5[%c0_9, %c0_10] : memref<1x1024xf32, #tpu.memory_space<vmem>>, vector<1x1024xf32>
    %12 = vector.broadcast %11 : vector<1x1024xf32> to vector<8x1024xf32>
    %13 = arith.addf %10, %12 : vector<8x1024xf32>
    %cst_11 = arith.constant 0.000000e+00 : f32
    %14 = vector.broadcast %cst_11 : f32 to vector<8x1024xf32>
    %15 = arith.maximumf %13, %14 : vector<8x1024xf32>
    %16 = arith.truncf %15 : vector<8x1024xf32> to vector<8x1024xbf16>
    %c0_12 = arith.constant 0 : index
    %c0_13 = arith.constant 0 : index
    %17 = vector.load %arg6[%c0_12, %c0_13] : memref<1024x256xbf16, #tpu.memory_space<vmem>>, vector<1024x256xbf16>
    %cst_14 = arith.constant dense<0.000000e+00> : vector<8x256xf32>
    %18 = tpu.matmul %16, %17, %cst_14 {dimension_numbers = #tpu.dot_dimension_numbers<[1], [0], [0], [1], [0, 0, 1, 1], [], []>} : vector<8x1024xbf16>, vector<1024x256xbf16>, vector<8x256xf32> -> vector<8x256xf32>
    %c0_15 = arith.constant 0 : index
    %c0_16 = arith.constant 0 : index
    %19 = vector.load %arg7[%c0_15, %c0_16] : memref<1x256xf32, #tpu.memory_space<vmem>>, vector<1x256xf32>
    %20 = vector.broadcast %19 : vector<1x256xf32> to vector<8x256xf32>
    %21 = arith.addf %18, %20 : vector<8x256xf32>
    %cst_17 = arith.constant 0.000000e+00 : f32
    %22 = vector.broadcast %cst_17 : f32 to vector<8x256xf32>
    %23 = arith.maximumf %21, %22 : vector<8x256xf32>
    %24 = arith.truncf %23 : vector<8x256xf32> to vector<8x256xbf16>
    %c0_18 = arith.constant 0 : index
    %c0_19 = arith.constant 0 : index
    %25 = vector.load %arg8[%c0_18, %c0_19] : memref<256x128xbf16, #tpu.memory_space<vmem>>, vector<256x128xbf16>
    %cst_20 = arith.constant dense<0.000000e+00> : vector<8x128xf32>
    %26 = tpu.matmul %24, %25, %cst_20 {dimension_numbers = #tpu.dot_dimension_numbers<[1], [0], [0], [1], [0, 0, 1, 1], [], []>} : vector<8x256xbf16>, vector<256x128xbf16>, vector<8x128xf32> -> vector<8x128xf32>
    %27 = vector.extract_strided_slice %26 {offsets = [0, 0], sizes = [8, 4], strides = [1, 1]} : vector<8x128xf32> to vector<8x4xf32>
    %c0_21 = arith.constant 0 : index
    %c0_22 = arith.constant 0 : index
    %28 = vector.load %arg9[%c0_21, %c0_22] : memref<1x4xf32, #tpu.memory_space<vmem>>, vector<1x4xf32>
    %29 = vector.broadcast %28 : vector<1x4xf32> to vector<8x4xf32>
    %30 = arith.addf %27, %29 : vector<8x4xf32>
    %cst_23 = arith.constant 0.000000e+00 : f32
    %31 = vector.broadcast %cst_23 : f32 to vector<8x4xf32>
    %32 = arith.maximumf %30, %31 : vector<8x4xf32>
    %c0_24 = arith.constant 0 : index
    %c0_25 = arith.constant 0 : index
    %33 = vector.load %arg10[%c0_24, %c0_25] : memref<8x4xf32, #tpu.memory_space<vmem>>, vector<8x4xf32>
    tpu.vector_store %arg10[%c0_24, %c0_25], %32 {strides = array<i32>} : memref<8x4xf32, #tpu.memory_space<vmem>>, vector<8x4xf32>,
    return
  }
  func.func @transform_0(%arg0: i32) -> (i32, i32) {
    %c0_i32 = arith.constant 0 : i32
    %c0_i32_0 = arith.constant 0 : i32
    return %arg0, %c0_i32 : i32, i32
  }
  func.func @transform_1(%arg0: i32) -> (i32, i32) {
    %c0_i32 = arith.constant 0 : i32
    %c0_i32_0 = arith.constant 0 : i32
    %c0_i32_1 = arith.constant 0 : i32
    return %c0_i32, %c0_i32_0 : i32, i32
  }
  func.func @transform_2(%arg0: i32) -> (i32, i32) {
    %c0_i32 = arith.constant 0 : i32
    %c0_i32_0 = arith.constant 0 : i32
    %c0_i32_1 = arith.constant 0 : i32
    return %c0_i32, %c0_i32_0 : i32, i32
  }
  func.func @transform_3(%arg0: i32) -> (i32, i32) {
    %c0_i32 = arith.constant 0 : i32
    %c0_i32_0 = arith.constant 0 : i32
    %c0_i32_1 = arith.constant 0 : i32
    return %c0_i32, %c0_i32_0 : i32, i32
  }
  func.func @transform_4(%arg0: i32) -> (i32, i32) {
    %c0_i32 = arith.constant 0 : i32
    %c0_i32_0 = arith.constant 0 : i32
    %c0_i32_1 = arith.constant 0 : i32
    return %c0_i32, %c0_i32_0 : i32, i32
  }
  func.func @transform_5(%arg0: i32) -> (i32, i32) {
    %c0_i32 = arith.constant 0 : i32
    %c0_i32_0 = arith.constant 0 : i32
    %c0_i32_1 = arith.constant 0 : i32
    return %c0_i32, %c0_i32_0 : i32, i32
  }
  func.func @transform_6(%arg0: i32) -> (i32, i32) {
    %c0_i32 = arith.constant 0 : i32
    %c0_i32_0 = arith.constant 0 : i32
    %c0_i32_1 = arith.constant 0 : i32
    return %c0_i32, %c0_i32_0 : i32, i32
  }
  func.func @transform_7(%arg0: i32) -> (i32, i32) {
    %c0_i32 = arith.constant 0 : i32
    %c0_i32_0 = arith.constant 0 : i32
    %c0_i32_1 = arith.constant 0 : i32
    return %c0_i32, %c0_i32_0 : i32, i32
  }
  func.func @transform_8(%arg0: i32) -> (i32, i32) {
    %c0_i32 = arith.constant 0 : i32
    %c0_i32_0 = arith.constant 0 : i32
    %c0_i32_1 = arith.constant 0 : i32
    return %c0_i32, %c0_i32_0 : i32, i32
  }
  func.func @transform_9(%arg0: i32) -> (i32, i32) {
    %c0_i32 = arith.constant 0 : i32
    %c0_i32_0 = arith.constant 0 : i32
    return %arg0, %c0_i32 : i32, i32
  }
}

</mosaic_0001>

<llo_original>
// kernel: easy_unet_generator.1
$region0: #{easy_unet_generator.1}
  #allocation0 [shape = 'u32[]', space=smem, size = 0x4, offset = 0x4, fixed_abs, tag = 'smem constant byte address 0x4 - core index']
  #allocation1 [shape = 'u32[144,128]{1,0:T(1,128)}', space=vmem, size = 0x12000, scoped, tag = 'internal scratch']
  %s0 = inlined_call_operand.vmem [shape: f32[8,8], index: 0, kind: input, shape index: {}]
  %s1 = inlined_call_operand.vmem [shape: f32[8,256], index: 1, kind: input, shape index: {}]
  %s2 = inlined_call_operand.vmem [shape: f32[1,256], index: 2, kind: input, shape index: {}]
  %s3 = inlined_call_operand.hbm [shape: bf16[256,1024], index: 3, kind: input, shape index: {}]
  %s4 = inlined_call_operand.vmem [shape: f32[1,1024], index: 4, kind: input, shape index: {}]
  %s5 = inlined_call_operand.hbm [shape: bf16[1024,256], index: 5, kind: input, shape index: {}]
  %s6 = inlined_call_operand.vmem [shape: f32[1,256], index: 6, kind: input, shape index: {}]
  %s7 = inlined_call_operand.hbm [shape: bf16[256,128], index: 7, kind: input, shape index: {}]
  %s8 = inlined_call_operand.vmem [shape: f32[1,4], index: 8, kind: input, shape index: {}]
  %s9 = inlined_call_operand.vmem [shape: f32[8,4], index: 9, kind: output, shape index: {}]
  %s10 = sld [smem:[#allocation0]]
  $region58: #{easy_unet_generator.1} parent=0
    _
  %s12 = ssub.s32 1, %s10
  %s13 = scalar_select 0, %s12, %s10
  $region1: #{easy_unet_generator.1} parent=0
    #allocation2 [shape = 'u8[524288]{0}', space=vmem, size = 0x80000, scoped, tag = 'input window, operand 3, single buffered']
    #allocation3 [shape = 's32[1]{0}', space=sflag, size = 0x4, scoped, tag = 'scoped memory for easy_unet_generator.1']
    #allocation4 [shape = 'u8[524288]{0}', space=vmem, size = 0x80000, scoped, tag = 'input window, operand 5, single buffered']
    #allocation5 [shape = 's32[1]{0}', space=sflag, size = 0x4, scoped, tag = 'scoped memory for easy_unet_generator.1']
    #allocation6 [shape = 'u8[65536]{0}', space=vmem, size = 0x10000, scoped, tag = 'input window, operand 7, single buffered']
    %14 = vsyncpa [#allocation3], 0
    %15 = vsyncpa [#allocation5], 0
    // Predicated region
    $region2: #{easy_unet_generator.1} parent=1 // pred_check
      _
    $region3: #{easy_unet_generator.1} parent=1 // pred_check_branch
      %17 = sbr.rel (0) target = $region5
    $region4: #{easy_unet_generator.1} parent=1 // pred_region
      _
    $region5: #{easy_unet_generator.1} parent=1 // pred_fallthru
      _
    // Predicated region
    $region6: #{easy_unet_generator.1} parent=1 // pred_check
      _
    $region7: #{easy_unet_generator.1} parent=1 // pred_check_branch
      %19 = sbr.rel (0) target = $region9
    $region8: #{easy_unet_generator.1} parent=1 // pred_region
      _
    $region9: #{easy_unet_generator.1} parent=1 // pred_fallthru
      _
    // Predicated region
    $region10: #{easy_unet_generator.1} parent=1 // pred_check
      _
    $region11: #{easy_unet_generator.1} parent=1 // pred_check_branch
      %21 = sbr.rel (0) target = $region13
    $region12: #{easy_unet_generator.1} parent=1 // pred_region
      _
    $region13: #{easy_unet_generator.1} parent=1 // pred_fallthru
      _
    // Predicated region
    $region14: #{easy_unet_generator.1} parent=1 // pred_check
      _
    $region15: #{easy_unet_generator.1} parent=1 // pred_check_branch
      %23 = sbr.rel (0) target = $region17
    $region16: #{easy_unet_generator.1} parent=1 // pred_region
      %s25 = ssub.s32 16384, 16384
      %26 = vsyncadd [#allocation3], %s25
      %s27 = sshll.u32 [#allocation2], 4
      %s28 = int_to_ptr.vmem [resolvable:$true] %s27
      %33 = dma.hbm_to_vmem [thread:$0]  %s3, 16384, %s28, [#allocation3], 512, 512, 32
    $region17: #{easy_unet_generator.1} parent=1 // pred_fallthru
      _
    // Predicated region
    $region18: #{easy_unet_generator.1} parent=1 // pred_check
      _
    $region19: #{easy_unet_generator.1} parent=1 // pred_check_branch
      %35 = sbr.rel (0) target = $region21
    $region20: #{easy_unet_generator.1} parent=1 // pred_region
      _
    $region21: #{easy_unet_generator.1} parent=1 // pred_fallthru
      _
    // Predicated region
    $region22: #{easy_unet_generator.1} parent=1 // pred_check
      _
    $region23: #{easy_unet_generator.1} parent=1 // pred_check_branch
      %37 = sbr.rel (0) target = $region25
    $region24: #{easy_unet_generator.1} parent=1 // pred_region
      %s39 = ssub.s32 16384, 16384
      %40 = vsyncadd [#allocation5], %s39
      %s41 = sshll.u32 [#allocation4], 4
      %s42 = int_to_ptr.vmem [resolvable:$true] %s41
      %47 = dma.hbm_to_vmem [thread:$0]  %s5, 16384, %s42, [#allocation5], 128, 128, 8
    $region25: #{easy_unet_generator.1} parent=1 // pred_fallthru
      _
    // Predicated region
    $region26: #{easy_unet_generator.1} parent=1 // pred_check
      _
    $region27: #{easy_unet_generator.1} parent=1 // pred_check_branch
      %49 = sbr.rel (0) target = $region29
    $region28: #{easy_unet_generator.1} parent=1 // pred_region
      _
    $region29: #{easy_unet_generator.1} parent=1 // pred_fallthru
      _
    // Predicated region
    $region30: #{easy_unet_generator.1} parent=1 // pred_check
      _
    $region31: #{easy_unet_generator.1} parent=1 // pred_check_branch
      %51 = sbr.rel (0) target = $region33
    $region32: #{easy_unet_generator.1} parent=1 // pred_region
      %s53 = ssub.s32 2048, 2048
      %54 = vsyncadd [#allocation5], %s53
      %s55 = sshll.u32 [#allocation6], 4
      %s56 = int_to_ptr.vmem [resolvable:$true] %s55
      %61 = dma.hbm_to_vmem [thread:$0]  %s7, 2048, %s56, [#allocation5], 64, 64, 4
    $region33: #{easy_unet_generator.1} parent=1 // pred_fallthru
      _
    // Predicated region
    $region34: #{easy_unet_generator.1} parent=1 // pred_check
      _
    $region35: #{easy_unet_generator.1} parent=1 // pred_check_branch
      %63 = sbr.rel (0) target = $region37
    $region36: #{easy_unet_generator.1} parent=1 // pred_region
      _
    $region37: #{easy_unet_generator.1} parent=1 // pred_fallthru
      _
    // Predicated region
    $region38: #{easy_unet_generator.1} parent=1 // pred_check
      _
    $region39: #{easy_unet_generator.1} parent=1 // pred_check_branch
      %65 = sbr.rel (0) target = $region41
    $region40: #{easy_unet_generator.1} parent=1 // pred_region
      %66 = dma.done [#allocation3], 16384
    $region41: #{easy_unet_generator.1} parent=1 // pred_fallthru
      _
    // Predicated region
    $region42: #{easy_unet_generator.1} parent=1 // pred_check
      _
    $region43: #{easy_unet_generator.1} parent=1 // pred_check_branch
      %68 = sbr.rel (0) target = $region45
    $region44: #{easy_unet_generator.1} parent=1 // pred_region
      %69 = dma.done [#allocation5], 16384
    $region45: #{easy_unet_generator.1} parent=1 // pred_fallthru
      _
    // Predicated region
    $region46: #{easy_unet_generator.1} parent=1 // pred_check
      _
    $region47: #{easy_unet_generator.1} parent=1 // pred_check_branch
      %71 = sbr.rel (0) target = $region49
    $region48: #{easy_unet_generator.1} parent=1 // pred_region
      %72 = dma.done [#allocation5], 2048
    $region49: #{easy_unet_generator.1} parent=1 // pred_fallthru
      _
    %v74 = vld [vmem:[%s0] sm:$0xff]
    %v75 = vld [vmem:[%s1] sm:$0xff]
    %v76 = vld [vmem:[%s1 + $0x8] sm:$0xff]
    %v77 = vld [vmem:[%s2] sm:$0x3]
    %v79 = vlaneseq
    %v80 = vshrl.u32 %v79, 7
    %v81 = vsub.s32 0, %v80
    %v82 = vrot.slane %v77, %v81
    %v83 = vlaneseq
    %v84 = vshrl.u32 %v83, 7
    %v85 = vsub.s32 1, %v84
    %v86 = vrot.slane %v77, %v85
    %vm89 = vcmask 64512
    %v91 = vsel %vm89, %v74, 0
    %93 = vmatprep.subr.mxu0 %v76
    %94 = vmatpush1.msra.mxu0 %v75
    %95 = vmatprep.subr.mxu0 0.0
    %96 = vmatpush1.msra.mxu0 0.0
    %97 = vmatprep.subr.mxu0 0.0
    %98 = vmatpush1.msra.mxu0 0.0
    %99 = vmatprep.subr.mxu0 0.0
    %100 = vmatpush1.msra.mxu0 0.0
    %101 = vmatprep.subr.mxu0 0.0
    %102 = vmatpush1.msra.mxu0 0.0
    %103 = vmatprep.subr.mxu0 0.0
    %104 = vmatpush1.msra.mxu0 0.0
    %105 = vmatprep.subr.mxu0 0.0
    %106 = vmatpush1.msra.mxu0 0.0
    %107 = vmatprep.subr.mxu0 0.0
    %108 = vmatpush1.msra.mxu0 0.0
    %109 = vmatprep.subr.mxu0 0.0
    %110 = vmatpush1.msra.mxu0 0.0
    %111 = vmatprep.subr.mxu0 0.0
    %112 = vmatpush1.msra.mxu0 0.0
    %113 = vmatprep.subr.mxu0 0.0
    %114 = vmatpush1.msra.mxu0 0.0
    %115 = vmatprep.subr.mxu0 0.0
    %116 = vmatpush1.msra.mxu0 0.0
    %117 = vmatprep.subr.mxu0 0.0
    %118 = vmatpush1.msra.mxu0 0.0
    %119 = vmatprep.subr.mxu0 0.0
    %120 = vmatpush1.msra.mxu0 0.0
    %121 = vmatprep.subr.mxu0 0.0
    %122 = vmatpush1.msra.mxu0 0.0
    %123 = vmatprep.subr.mxu0 0.0
    %124 = vmatpush1.msra.mxu0 0.0
    %125 = vmatprep.subr.mxu0 0.0
    %126 = vmatpush1.msra.mxu0 0.0
    %127 = vmatprep.subr.mxu0 0.0
    %128 = vmatpush1.msra.mxu0 0.0
    %129 = vmatprep.subr.mxu0 0.0
    %130 = vmatpush1.msra.mxu0 0.0
    %131 = vmatprep.subr.mxu0 0.0
    %132 = vmatpush1.msra.mxu0 0.0
    %133 = vmatprep.subr.mxu0 0.0
    %134 = vmatpush1.msra.mxu0 0.0
    %135 = vmatprep.subr.mxu0 0.0
    %136 = vmatpush1.msra.mxu0 0.0
    %137 = vmatprep.subr.mxu0 0.0
    %138 = vmatpush1.msra.mxu0 0.0
    %139 = vmatprep.subr.mxu0 0.0
    %140 = vmatpush1.msra.mxu0 0.0
    %141 = vmatprep.subr.mxu0 0.0
    %142 = vmatpush1.msra.mxu0 0.0
    %143 = vmatprep.subr.mxu0 0.0
    %144 = vmatpush1.msra.mxu0 0.0
    %145 = vmatprep.subr.mxu0 0.0
    %146 = vmatpush1.msra.mxu0 0.0
    %147 = vmatprep.subr.mxu0 0.0
    %148 = vmatpush1.msra.mxu0 0.0
    %149 = vmatprep.subr.mxu0 0.0
    %150 = vmatpush1.msra.mxu0 0.0
    %151 = vmatprep.subr.mxu0 0.0
    %152 = vmatpush1.msra.mxu0 0.0
    %153 = vmatprep.subr.mxu0 0.0
    %154 = vmatpush1.msra.mxu0 0.0
    %155 = vmatprep.subr.mxu0 0.0
    %156 = vmatpush1.msra.mxu0 0.0
    %157 = vmatprep.mubr.f32.mxu0 0.0
    %158 = vmatmul.mubr.f32.gmra.mrb[0].mxu0 %v91
    %v159 = vpop.f32.mrb[0].mxu0
    %v160 = vadd.f32 %v82, %v159
    %v161 = vpop.f32.mrb[0].mxu0
    %v162 = vadd.f32 %v86, %v161
    %163 = vdwg.mxu0
    %v164 = vmax.f32 %v160, 0.0
    %v165 = vmax.f32 %v162, 0.0
    %v166 = vpack.c.bf16 %v164, %v164
    %v167 = vpack.c.bf16 %v165, %v165
    %v168 = vld [vmem:[#allocation2] sm:$0xff]
    %v169 = vld [vmem:[#allocation2 + $0x8] sm:$0xff]
    %v170 = vld [vmem:[#allocation2 + $0x10] sm:$0xff]
    %v171 = vld [vmem:[#allocation2 + $0x18] sm:$0xff]
    %v172 = vld [vmem:[#allocation2 + $0x20] sm:$0xff]
    %v173 = vld [vmem:[#allocation2 + $0x28] sm:$0xff]
    %v174 = vld [vmem:[#allocation2 + $0x30] sm:$0xff]
    %v175 = vld [vmem:[#allocation2 + $0x38] sm:$0xff]
    %v176 = vld [vmem:[#allocation2 + $0x40] sm:$0xff]
    %v177 = vld [vmem:[#allocation2 + $0x48] sm:$0xff]
    %v178 = vld [vmem:[#allocation2 + $0x50] sm:$0xff]
    %v179 = vld [vmem:[#allocation2 + $0x58] sm:$0xff]
    %v180 = vld [vmem:[#allocation2 + $0x60] sm:$0xff]
    %v181 = vld [vmem:[#allocation2 + $0x68] sm:$0xff]
    %v182 = vld [vmem:[#allocation2 + $0x70] sm:$0xff]
    %v183 = vld [vmem:[#allocation2 + $0x78] sm:$0xff]
    %v184 = vld [vmem:[#allocation2 + $0x80] sm:$0xff]
    %v185 = vld [vmem:[#allocation2 + $0x88] sm:$0xff]
    %v186 = vld [vmem:[#allocation2 + $0x90] sm:$0xff]
    %v187 = vld [vmem:[#allocation2 + $0x98] sm:$0xff]
    %v188 = vld [vmem:[#allocation2 + $0xa0] sm:$0xff]
    %v189 = vld [vmem:[#allocation2 + $0xa8] sm:$0xff]
    %v190 = vld [vmem:[#allocation2 + $0xb0] sm:$0xff]
    %v191 = vld [vmem:[#allocation2 + $0xb8] sm:$0xff]
    %v192 = vld [vmem:[#allocation2 + $0xc0] sm:$0xff]
    %v193 = vld [vmem:[#allocation2 + $0xc8] sm:$0xff]
    %v194 = vld [vmem:[#allocation2 + $0xd0] sm:$0xff]
    %v195 = vld [vmem:[#allocation2 + $0xd8] sm:$0xff]
    %v196 = vld [vmem:[#allocation2 + $0xe0] sm:$0xff]
    %v197 = vld [vmem:[#allocation2 + $0xe8] sm:$0xff]
    %v198 = vld [vmem:[#allocation2 + $0xf0] sm:$0xff]
    %v199 = vld [vmem:[#allocation2 + $0xf8] sm:$0xff]
    %v200 = vld [vmem:[#allocation2 + $0x100] sm:$0xff]
    %v201 = vld [vmem:[#allocation2 + $0x108] sm:$0xff]
    %v202 = vld [vmem:[#allocation2 + $0x110] sm:$0xff]
    %v203 = vld [vmem:[#allocation2 + $0x118] sm:$0xff]
    %v204 = vld [vmem:[#allocation2 + $0x120] sm:$0xff]
    %v205 = vld [vmem:[#allocation2 + $0x128] sm:$0xff]
    %v206 = vld [vmem:[#allocation2 + $0x130] sm:$0xff]
    %v207 = vld [vmem:[#allocation2 + $0x138] sm:$0xff]
    %v208 = vld [vmem:[#allocation2 + $0x140] sm:$0xff]
    %v209 = vld [vmem:[#allocation2 + $0x148] sm:$0xff]
    %v210 = vld [vmem:[#allocation2 + $0x150] sm:$0xff]
    %v211 = vld [vmem:[#allocation2 + $0x158] sm:$0xff]
    %v212 = vld [vmem:[#allocation2 + $0x160] sm:$0xff]
    %v213 = vld [vmem:[#allocation2 + $0x168] sm:$0xff]
    %v214 = vld [vmem:[#allocation2 + $0x170] sm:$0xff]
    %v215 = vld [vmem:[#allocation2 + $0x178] sm:$0xff]
    %v216 = vld [vmem:[#allocation2 + $0x180] sm:$0xff]
    %v217 = vld [vmem:[#allocation2 + $0x188] sm:$0xff]
    %v218 = vld [vmem:[#allocation2 + $0x190] sm:$0xff]
    %v219 = vld [vmem:[#allocation2 + $0x198] sm:$0xff]
    %v220 = vld [vmem:[#allocation2 + $0x1a0] sm:$0xff]
    %v221 = vld [vmem:[#allocation2 + $0x1a8] sm:$0xff]
    %v222 = vld [vmem:[#allocation2 + $0x1b0] sm:$0xff]
    %v223 = vld [vmem:[#allocation2 + $0x1b8] sm:$0xff]
    %v224 = vld [vmem:[#allocation2 + $0x1c0] sm:$0xff]
    %v225 = vld [vmem:[#allocation2 + $0x1c8] sm:$0xff]
    %v226 = vld [vmem:[#allocation2 + $0x1d0] sm:$0xff]
    %v227 = vld [vmem:[#allocation2 + $0x1d8] sm:$0xff]
    %v228 = vld [vmem:[#allocation2 + $0x1e0] sm:$0xff]
    %v229 = vld [vmem:[#allocation2 + $0x1e8] sm:$0xff]
    %v230 = vld [vmem:[#allocation2 + $0x1f0] sm:$0xff]
    %v231 = vld [vmem:[#allocation2 + $0x1f8] sm:$0xff]
    %v232 = vld [vmem:[#allocation2 + $0x200] sm:$0xff]
    %v233 = vld [vmem:[#allocation2 + $0x208] sm:$0xff]
    %v234 = vld [vmem:[#allocation2 + $0x210] sm:$0xff]
    %v235 = vld [vmem:[#allocation2 + $0x218] sm:$0xff]
    %v236 = vld [vmem:[#allocation2 + $0x220] sm:$0xff]
    %v237 = vld [vmem:[#allocation2 + $0x228] sm:$0xff]
    %v238 = vld [vmem:[#allocation2 + $0x230] sm:$0xff]
    %v239 = vld [vmem:[#allocation2 + $0x238] sm:$0xff]
    %v240 = vld [vmem:[#allocation2 + $0x240] sm:$0xff]
    %v241 = vld [vmem:[#allocation2 + $0x248] sm:$0xff]
    %v242 = vld [vmem:[#allocation2 + $0x250] sm:$0xff]
    %v243 = vld [vmem:[#allocation2 + $0x258] sm:$0xff]
    %v244 = vld [vmem:[#allocation2 + $0x260] sm:$0xff]
    %v245 = vld [vmem:[#allocation2 + $0x268] sm:$0xff]
    %v246 = vld [vmem:[#allocation2 + $0x270] sm:$0xff]
    %v247 = vld [vmem:[#allocation2 + $0x278] sm:$0xff]
    %v248 = vld [vmem:[#allocation2 + $0x280] sm:$0xff]
    %v249 = vld [vmem:[#allocation2 + $0x288] sm:$0xff]
    %v250 = vld [vmem:[#allocation2 + $0x290] sm:$0xff]
    %v251 = vld [vmem:[#allocation2 + $0x298] sm:$0xff]
    %v252 = vld [vmem:[#allocation2 + $0x2a0] sm:$0xff]
    %v253 = vld [vmem:[#allocation2 + $0x2a8] sm:$0xff]
    %v254 = vld [vmem:[#allocation2 + $0x2b0] sm:$0xff]
    %v255 = vld [vmem:[#allocation2 + $0x2b8] sm:$0xff]
    %v256 = vld [vmem:[#allocation2 + $0x2c0] sm:$0xff]
    %v257 = vld [vmem:[#allocation2 + $0x2c8] sm:$0xff]
    %v258 = vld [vmem:[#allocation2 + $0x2d0] sm:$0xff]
    %v259 = vld [vmem:[#allocation2 + $0x2d8] sm:$0xff]
    %v260 = vld [vmem:[#allocation2 + $0x2e0] sm:$0xff]
    %v261 = vld [vmem:[#allocation2 + $0x2e8] sm:$0xff]
    %v262 = vld [vmem:[#allocation2 + $0x2f0] sm:$0xff]
    %v263 = vld [vmem:[#allocation2 + $0x2f8] sm:$0xff]
    %v264 = vld [vmem:[#allocation2 + $0x300] sm:$0xff]
    %v265 = vld [vmem:[#allocation2 + $0x308] sm:$0xff]
    %v266 = vld [vmem:[#allocation2 + $0x310] sm:$0xff]
    %v267 = vld [vmem:[#allocation2 + $0x318] sm:$0xff]
    %v268 = vld [vmem:[#allocation2 + $0x320] sm:$0xff]
    %v269 = vld [vmem:[#allocation2 + $0x328] sm:$0xff]
    %v270 = vld [vmem:[#allocation2 + $0x330] sm:$0xff]
    %v271 = vld [vmem:[#allocation2 + $0x338] sm:$0xff]
    %v272 = vld [vmem:[#allocation2 + $0x340] sm:$0xff]
    %v273 = vld [vmem:[#allocation2 + $0x348] sm:$0xff]
    %v274 = vld [vmem:[#allocation2 + $0x350] sm:$0xff]
    %v275 = vld [vmem:[#allocation2 + $0x358] sm:$0xff]
    %v276 = vld [vmem:[#allocation2 + $0x360] sm:$0xff]
    %v277 = vld [vmem:[#allocation2 + $0x368] sm:$0xff]
    %v278 = vld [vmem:[#allocation2 + $0x370] sm:$0xff]
    %v279 = vld [vmem:[#allocation2 + $0x378] sm:$0xff]
    %v280 = vld [vmem:[#allocation2 + $0x380] sm:$0xff]
    %v281 = vld [vmem:[#allocation2 + $0x388] sm:$0xff]
    %v282 = vld [vmem:[#allocation2 + $0x390] sm:$0xff]
    %v283 = vld [vmem:[#allocation2 + $0x398] sm:$0xff]
    %v284 = vld [vmem:[#allocation2 + $0x3a0] sm:$0xff]
    %v285 = vld [vmem:[#allocation2 + $0x3a8] sm:$0xff]
    %v286 = vld [vmem:[#allocation2 + $0x3b0] sm:$0xff]
    %v287 = vld [vmem:[#allocation2 + $0x3b8] sm:$0xff]
    %v288 = vld [vmem:[#allocation2 + $0x3c0] sm:$0xff]
    %v289 = vld [vmem:[#allocation2 + $0x3c8] sm:$0xff]
    %v290 = vld [vmem:[#allocation2 + $0x3d0] sm:$0xff]
    %v291 = vld [vmem:[#allocation2 + $0x3d8] sm:$0xff]
    %v292 = vld [vmem:[#allocation2 + $0x3e0] sm:$0xff]
    %v293 = vld [vmem:[#allocation2 + $0x3e8] sm:$0xff]
    %v294 = vld [vmem:[#allocation2 + $0x3f0] sm:$0xff]
    %v295 = vld [vmem:[#allocation2 + $0x3f8] sm:$0xff]
    %v296 = vld [vmem:[%s4] sm:$0xff]
    %v298 = vlaneseq
    %v299 = vshrl.u32 %v298, 7
    %v300 = vsub.s32 0, %v299
    %v301 = vrot.slane %v296, %v300
    %v302 = vlaneseq
    %v303 = vshrl.u32 %v302, 7
    %v304 = vsub.s32 1, %v303
    %v305 = vrot.slane %v296, %v304
    %v306 = vlaneseq
    %v307 = vshrl.u32 %v306, 7
    %v308 = vsub.s32 2, %v307
    %v309 = vrot.slane %v296, %v308
    %v310 = vlaneseq
    %v311 = vshrl.u32 %v310, 7
    %v312 = vsub.s32 3, %v311
    %v313 = vrot.slane %v296, %v312
    %v314 = vlaneseq
    %v315 = vshrl.u32 %v314, 7
    %v316 = vsub.s32 4, %v315
    %v317 = vrot.slane %v296, %v316
    %v318 = vlaneseq
    %v319 = vshrl.u32 %v318, 7
    %v320 = vsub.s32 5, %v319
    %v321 = vrot.slane %v296, %v320
    %v322 = vlaneseq
    %v323 = vshrl.u32 %v322, 7
    %v324 = vsub.s32 6, %v323
    %v325 = vrot.slane %v296, %v324
    %v326 = vlaneseq
    %v327 = vshrl.u32 %v326, 7
    %v328 = vsub.s32 7, %v327
    %v329 = vrot.slane %v296, %v328
    %v466 = vunpack.c.l.b16 %v168
    %v467 = vunpack.c.h.b16 %v168
    %v468 = vunpack.c.l.b16 %v169
    %v469 = vunpack.c.h.b16 %v169
    %v470 = vunpack.c.l.b16 %v170
    %v471 = vunpack.c.h.b16 %v170
    %v472 = vunpack.c.l.b16 %v171
    %v473 = vunpack.c.h.b16 %v171
    %v474 = vunpack.c.l.b16 %v172
    %v475 = vunpack.c.h.b16 %v172
    %v476 = vunpack.c.l.b16 %v173
    %v477 = vunpack.c.h.b16 %v173
    %v478 = vunpack.c.l.b16 %v174
    %v479 = vunpack.c.h.b16 %v174
    %v480 = vunpack.c.l.b16 %v175
    %v481 = vunpack.c.h.b16 %v175
    %v482 = vunpack.c.l.b16 %v176
    %v483 = vunpack.c.h.b16 %v176
    %v484 = vunpack.c.l.b16 %v177
    %v485 = vunpack.c.h.b16 %v177
    %v486 = vunpack.c.l.b16 %v178
    %v487 = vunpack.c.h.b16 %v178
    %v488 = vunpack.c.l.b16 %v179
    %v489 = vunpack.c.h.b16 %v179
    %v490 = vunpack.c.l.b16 %v180
    %v491 = vunpack.c.h.b16 %v180
    %v492 = vunpack.c.l.b16 %v181
    %v493 = vunpack.c.h.b16 %v181
    %v494 = vunpack.c.l.b16 %v182
    %v495 = vunpack.c.h.b16 %v182
    %v496 = vunpack.c.l.b16 %v183
    %v497 = vunpack.c.h.b16 %v183
    %v498 = vunpack.c.l.b16 %v184
    %v499 = vunpack.c.h.b16 %v184
    %v500 = vunpack.c.l.b16 %v185
    %v501 = vunpack.c.h.b16 %v185
    %v502 = vunpack.c.l.b16 %v186
    %v503 = vunpack.c.h.b16 %v186
    %v504 = vunpack.c.l.b16 %v187
    %v505 = vunpack.c.h.b16 %v187
    %v506 = vunpack.c.l.b16 %v188
    %v507 = vunpack.c.h.b16 %v188
    %v508 = vunpack.c.l.b16 %v189
    %v509 = vunpack.c.h.b16 %v189
    %v510 = vunpack.c.l.b16 %v190
    %v511 = vunpack.c.h.b16 %v190
    %v512 = vunpack.c.l.b16 %v191
    %v513 = vunpack.c.h.b16 %v191
    %v514 = vunpack.c.l.b16 %v192
    %v515 = vunpack.c.h.b16 %v192
    %v516 = vunpack.c.l.b16 %v193
    %v517 = vunpack.c.h.b16 %v193
    %v518 = vunpack.c.l.b16 %v194
    %v519 = vunpack.c.h.b16 %v194
    %v520 = vunpack.c.l.b16 %v195
    %v521 = vunpack.c.h.b16 %v195
    %v522 = vunpack.c.l.b16 %v196
    %v523 = vunpack.c.h.b16 %v196
    %v524 = vunpack.c.l.b16 %v197
    %v525 = vunpack.c.h.b16 %v197
    %v526 = vunpack.c.l.b16 %v198
    %v527 = vunpack.c.h.b16 %v198
    %v528 = vunpack.c.l.b16 %v199
    %v529 = vunpack.c.h.b16 %v199
    %v530 = vunpack.c.l.b16 %v200
    %v531 = vunpack.c.h.b16 %v200
    %v532 = vunpack.c.l.b16 %v201
    %v533 = vunpack.c.h.b16 %v201
    %v534 = vunpack.c.l.b16 %v202
    %v535 = vunpack.c.h.b16 %v202
    %v536 = vunpack.c.l.b16 %v203
    %v537 = vunpack.c.h.b16 %v203
    %v538 = vunpack.c.l.b16 %v204
    %v539 = vunpack.c.h.b16 %v204
    %v540 = vunpack.c.l.b16 %v205
    %v541 = vunpack.c.h.b16 %v205
    %v542 = vunpack.c.l.b16 %v206
    %v543 = vunpack.c.h.b16 %v206
    %v544 = vunpack.c.l.b16 %v207
    %v545 = vunpack.c.h.b16 %v207
    %v546 = vunpack.c.l.b16 %v208
    %v547 = vunpack.c.h.b16 %v208
    %v548 = vunpack.c.l.b16 %v209
    %v549 = vunpack.c.h.b16 %v209
    %v550 = vunpack.c.l.b16 %v210
    %v551 = vunpack.c.h.b16 %v210
    %v552 = vunpack.c.l.b16 %v211
    %v553 = vunpack.c.h.b16 %v211
    %v554 = vunpack.c.l.b16 %v212
    %v555 = vunpack.c.h.b16 %v212
    %v556 = vunpack.c.l.b16 %v213
    %v557 = vunpack.c.h.b16 %v213
    %v558 = vunpack.c.l.b16 %v214
    %v559 = vunpack.c.h.b16 %v214
    %v560 = vunpack.c.l.b16 %v215
    %v561 = vunpack.c.h.b16 %v215
    %v562 = vunpack.c.l.b16 %v216
    %v563 = vunpack.c.h.b16 %v216
    %v564 = vunpack.c.l.b16 %v217
    %v565 = vunpack.c.h.b16 %v217
    %v566 = vunpack.c.l.b16 %v218
    %v567 = vunpack.c.h.b16 %v218
    %v568 = vunpack.c.l.b16 %v219
    %v569 = vunpack.c.h.b16 %v219
    %v570 = vunpack.c.l.b16 %v220
    %v571 = vunpack.c.h.b16 %v220
    %v572 = vunpack.c.l.b16 %v221
    %v573 = vunpack.c.h.b16 %v221
    %v574 = vunpack.c.l.b16 %v222
    %v575 = vunpack.c.h.b16 %v222
    %v576 = vunpack.c.l.b16 %v223
    %v577 = vunpack.c.h.b16 %v223
    %v578 = vunpack.c.l.b16 %v224
    %v579 = vunpack.c.h.b16 %v224
    %v580 = vunpack.c.l.b16 %v225
    %v581 = vunpack.c.h.b16 %v225
    %v582 = vunpack.c.l.b16 %v226
    %v583 = vunpack.c.h.b16 %v226
    %v584 = vunpack.c.l.b16 %v227
    %v585 = vunpack.c.h.b16 %v227
    %v586 = vunpack.c.l.b16 %v228
    %v587 = vunpack.c.h.b16 %v228
    %v588 = vunpack.c.l.b16 %v229
    %v589 = vunpack.c.h.b16 %v229
    %v590 = vunpack.c.l.b16 %v230
    %v591 = vunpack.c.h.b16 %v230
    %v592 = vunpack.c.l.b16 %v231
    %v593 = vunpack.c.h.b16 %v231
    %v594 = vunpack.c.l.b16 %v232
    %v595 = vunpack.c.h.b16 %v232
    %v596 = vunpack.c.l.b16 %v233
    %v597 = vunpack.c.h.b16 %v233
    %v598 = vunpack.c.l.b16 %v234
    %v599 = vunpack.c.h.b16 %v234
    %v600 = vunpack.c.l.b16 %v235
    %v601 = vunpack.c.h.b16 %v235
    %v602 = vunpack.c.l.b16 %v236
    %v603 = vunpack.c.h.b16 %v236
    %v604 = vunpack.c.l.b16 %v237
    %v605 = vunpack.c.h.b16 %v237
    %v606 = vunpack.c.l.b16 %v238
    %v607 = vunpack.c.h.b16 %v238
    %v608 = vunpack.c.l.b16 %v239
    %v609 = vunpack.c.h.b16 %v239
    %v610 = vunpack.c.l.b16 %v240
    %v611 = vunpack.c.h.b16 %v240
    %v612 = vunpack.c.l.b16 %v241
    %v613 = vunpack.c.h.b16 %v241
    %v614 = vunpack.c.l.b16 %v242
    %v615 = vunpack.c.h.b16 %v242
    %v616 = vunpack.c.l.b16 %v243
    %v617 = vunpack.c.h.b16 %v243
    %v618 = vunpack.c.l.b16 %v244
    %v619 = vunpack.c.h.b16 %v244
    %v620 = vunpack.c.l.b16 %v245
    %v621 = vunpack.c.h.b16 %v245
    %v622 = vunpack.c.l.b16 %v246
    %v623 = vunpack.c.h.b16 %v246
    %v624 = vunpack.c.l.b16 %v247
    %v625 = vunpack.c.h.b16 %v247
    %v626 = vunpack.c.l.b16 %v248
    %v627 = vunpack.c.h.b16 %v248
    %v628 = vunpack.c.l.b16 %v249
    %v629 = vunpack.c.h.b16 %v249
    %v630 = vunpack.c.l.b16 %v250
    %v631 = vunpack.c.h.b16 %v250
    %v632 = vunpack.c.l.b16 %v251
    %v633 = vunpack.c.h.b16 %v251
    %v634 = vunpack.c.l.b16 %v252
    %v635 = vunpack.c.h.b16 %v252
    %v636 = vunpack.c.l.b16 %v253
    %v637 = vunpack.c.h.b16 %v253
    %v638 = vunpack.c.l.b16 %v254
    %v639 = vunpack.c.h.b16 %v254
    %v640 = vunpack.c.l.b16 %v255
    %v641 = vunpack.c.h.b16 %v255
    %v642 = vunpack.c.l.b16 %v256
    %v643 = vunpack.c.h.b16 %v256
    %v644 = vunpack.c.l.b16 %v257
    %v645 = vunpack.c.h.b16 %v257
    %v646 = vunpack.c.l.b16 %v258
    %v647 = vunpack.c.h.b16 %v258
    %v648 = vunpack.c.l.b16 %v259
    %v649 = vunpack.c.h.b16 %v259
    %v650 = vunpack.c.l.b16 %v260
    %v651 = vunpack.c.h.b16 %v260
    %v652 = vunpack.c.l.b16 %v261
    %v653 = vunpack.c.h.b16 %v261
    %v654 = vunpack.c.l.b16 %v262
    %v655 = vunpack.c.h.b16 %v262
    %v656 = vunpack.c.l.b16 %v263
    %v657 = vunpack.c.h.b16 %v263
    %v658 = vunpack.c.l.b16 %v264
    %v659 = vunpack.c.h.b16 %v264
    %v660 = vunpack.c.l.b16 %v265
    %v661 = vunpack.c.h.b16 %v265
    %v662 = vunpack.c.l.b16 %v266
    %v663 = vunpack.c.h.b16 %v266
    %v664 = vunpack.c.l.b16 %v267
    %v665 = vunpack.c.h.b16 %v267
    %v666 = vunpack.c.l.b16 %v268
    %v667 = vunpack.c.h.b16 %v268
    %v668 = vunpack.c.l.b16 %v269
    %v669 = vunpack.c.h.b16 %v269
    %v670 = vunpack.c.l.b16 %v270
    %v671 = vunpack.c.h.b16 %v270
    %v672 = vunpack.c.l.b16 %v271
    %v673 = vunpack.c.h.b16 %v271
    %v674 = vunpack.c.l.b16 %v272
    %v675 = vunpack.c.h.b16 %v272
    %v676 = vunpack.c.l.b16 %v273
    %v677 = vunpack.c.h.b16 %v273
    %v678 = vunpack.c.l.b16 %v274
    %v679 = vunpack.c.h.b16 %v274
    %v680 = vunpack.c.l.b16 %v275
    %v681 = vunpack.c.h.b16 %v275
    %v682 = vunpack.c.l.b16 %v276
    %v683 = vunpack.c.h.b16 %v276
    %v684 = vunpack.c.l.b16 %v277
    %v685 = vunpack.c.h.b16 %v277
    %v686 = vunpack.c.l.b16 %v278
    %v687 = vunpack.c.h.b16 %v278
    %v688 = vunpack.c.l.b16 %v279
    %v689 = vunpack.c.h.b16 %v279
    %v690 = vunpack.c.l.b16 %v280
    %v691 = vunpack.c.h.b16 %v280
    %v692 = vunpack.c.l.b16 %v281
    %v693 = vunpack.c.h.b16 %v281
    %v694 = vunpack.c.l.b16 %v282
    %v695 = vunpack.c.h.b16 %v282
    %v696 = vunpack.c.l.b16 %v283
    %v697 = vunpack.c.h.b16 %v283
    %v698 = vunpack.c.l.b16 %v284
    %v699 = vunpack.c.h.b16 %v284
    %v700 = vunpack.c.l.b16 %v285
    %v701 = vunpack.c.h.b16 %v285
    %v702 = vunpack.c.l.b16 %v286
    %v703 = vunpack.c.h.b16 %v286
    %v704 = vunpack.c.l.b16 %v287
    %v705 = vunpack.c.h.b16 %v287
    %v706 = vunpack.c.l.b16 %v288
    %v707 = vunpack.c.h.b16 %v288
    %v708 = vunpack.c.l.b16 %v289
    %v709 = vunpack.c.h.b16 %v289
    %v710 = vunpack.c.l.b16 %v290
    %v711 = vunpack.c.h.b16 %v290
    %v712 = vunpack.c.l.b16 %v291
    %v713 = vunpack.c.h.b16 %v291
    %v714 = vunpack.c.l.b16 %v292
    %v715 = vunpack.c.h.b16 %v292
    %v716 = vunpack.c.l.b16 %v293
    %v717 = vunpack.c.h.b16 %v293
    %v718 = vunpack.c.l.b16 %v294
    %v719 = vunpack.c.h.b16 %v294
    %v720 = vunpack.c.l.b16 %v295
    %v721 = vunpack.c.h.b16 %v295
    %v722 = vpack.c.b16 %v474, %v466
    %v723 = vpack.c.b16 %v475, %v467
    %v724 = vpack.c.b16 %v476, %v468
    %v725 = vpack.c.b16 %v477, %v469
    %v726 = vpack.c.b16 %v478, %v470
    %v727 = vpack.c.b16 %v479, %v471
    %v728 = vpack.c.b16 %v480, %v472
    %v729 = vpack.c.b16 %v481, %v473
    %v730 = vpack.c.b16 %v490, %v482
    %v731 = vpack.c.b16 %v491, %v483
    %v732 = vpack.c.b16 %v492, %v484
    %v733 = vpack.c.b16 %v493, %v485
    %v734 = vpack.c.b16 %v494, %v486
    %v735 = vpack.c.b16 %v495, %v487
    %v736 = vpack.c.b16 %v496, %v488
    %v737 = vpack.c.b16 %v497, %v489
    %v738 = vpack.c.b16 %v506, %v498
    %v739 = vpack.c.b16 %v507, %v499
    %v740 = vpack.c.b16 %v508, %v500
    %v741 = vpack.c.b16 %v509, %v501
    %v742 = vpack.c.b16 %v510, %v502
    %v743 = vpack.c.b16 %v511, %v503
    %v744 = vpack.c.b16 %v512, %v504
    %v745 = vpack.c.b16 %v513, %v505
    %v746 = vpack.c.b16 %v522, %v514
    %v747 = vpack.c.b16 %v523, %v515
    %v748 = vpack.c.b16 %v524, %v516
    %v749 = vpack.c.b16 %v525, %v517
    %v750 = vpack.c.b16 %v526, %v518
    %v751 = vpack.c.b16 %v527, %v519
    %v752 = vpack.c.b16 %v528, %v520
    %v753 = vpack.c.b16 %v529, %v521
    %v754 = vpack.c.b16 %v538, %v530
    %v755 = vpack.c.b16 %v539, %v531
    %v756 = vpack.c.b16 %v540, %v532
    %v757 = vpack.c.b16 %v541, %v533
    %v758 = vpack.c.b16 %v542, %v534
    %v759 = vpack.c.b16 %v543, %v535
    %v760 = vpack.c.b16 %v544, %v536
    %v761 = vpack.c.b16 %v545, %v537
    %v762 = vpack.c.b16 %v554, %v546
    %v763 = vpack.c.b16 %v555, %v547
    %v764 = vpack.c.b16 %v556, %v548
    %v765 = vpack.c.b16 %v557, %v549
    %v766 = vpack.c.b16 %v558, %v550
    %v767 = vpack.c.b16 %v559, %v551
    %v768 = vpack.c.b16 %v560, %v552
    %v769 = vpack.c.b16 %v561, %v553
    %v770 = vpack.c.b16 %v570, %v562
    %v771 = vpack.c.b16 %v571, %v563
    %v772 = vpack.c.b16 %v572, %v564
    %v773 = vpack.c.b16 %v573, %v565
    %v774 = vpack.c.b16 %v574, %v566
    %v775 = vpack.c.b16 %v575, %v567
    %v776 = vpack.c.b16 %v576, %v568
    %v777 = vpack.c.b16 %v577, %v569
    %v778 = vpack.c.b16 %v586, %v578
    %v779 = vpack.c.b16 %v587, %v579
    %v780 = vpack.c.b16 %v588, %v580
    %v781 = vpack.c.b16 %v589, %v581
    %v782 = vpack.c.b16 %v590, %v582
    %v783 = vpack.c.b16 %v591, %v583
    %v784 = vpack.c.b16 %v592, %v584
    %v785 = vpack.c.b16 %v593, %v585
    %v786 = vpack.c.b16 %v602, %v594
    %v787 = vpack.c.b16 %v603, %v595
    %v788 = vpack.c.b16 %v604, %v596
    %v789 = vpack.c.b16 %v605, %v597
    %v790 = vpack.c.b16 %v606, %v598
    %v791 = vpack.c.b16 %v607, %v599
    %v792 = vpack.c.b16 %v608, %v600
    %v793 = vpack.c.b16 %v609, %v601
    %v794 = vpack.c.b16 %v618, %v610
    %v795 = vpack.c.b16 %v619, %v611
    %v796 = vpack.c.b16 %v620, %v612
    %v797 = vpack.c.b16 %v621, %v613
    %v798 = vpack.c.b16 %v622, %v614
    %v799 = vpack.c.b16 %v623, %v615
    %v800 = vpack.c.b16 %v624, %v616
    %v801 = vpack.c.b16 %v625, %v617
    %v802 = vpack.c.b16 %v634, %v626
    %v803 = vpack.c.b16 %v635, %v627
    %v804 = vpack.c.b16 %v636, %v628
    %v805 = vpack.c.b16 %v637, %v629
    %v806 = vpack.c.b16 %v638, %v630
    %v807 = vpack.c.b16 %v639, %v631
    %v808 = vpack.c.b16 %v640, %v632
    %v809 = vpack.c.b16 %v641, %v633
    %v810 = vpack.c.b16 %v650, %v642
    %v811 = vpack.c.b16 %v651, %v643
    %v812 = vpack.c.b16 %v652, %v644
    %v813 = vpack.c.b16 %v653, %v645
    %v814 = vpack.c.b16 %v654, %v646
    %v815 = vpack.c.b16 %v655, %v647
    %v816 = vpack.c.b16 %v656, %v648
    %v817 = vpack.c.b16 %v657, %v649
    %v818 = vpack.c.b16 %v666, %v658
    %v819 = vpack.c.b16 %v667, %v659
    %v820 = vpack.c.b16 %v668, %v660
    %v821 = vpack.c.b16 %v669, %v661
    %v822 = vpack.c.b16 %v670, %v662
    %v823 = vpack.c.b16 %v671, %v663
    %v824 = vpack.c.b16 %v672, %v664
    %v825 = vpack.c.b16 %v673, %v665
    %v826 = vpack.c.b16 %v682, %v674
    %v827 = vpack.c.b16 %v683, %v675
    %v828 = vpack.c.b16 %v684, %v676
    %v829 = vpack.c.b16 %v685, %v677
    %v830 = vpack.c.b16 %v686, %v678
    %v831 = vpack.c.b16 %v687, %v679
    %v832 = vpack.c.b16 %v688, %v680
    %v833 = vpack.c.b16 %v689, %v681
    %v834 = vpack.c.b16 %v698, %v690
    %v835 = vpack.c.b16 %v699, %v691
    %v836 = vpack.c.b16 %v700, %v692
    %v837 = vpack.c.b16 %v701, %v693
    %v838 = vpack.c.b16 %v702, %v694
    %v839 = vpack.c.b16 %v703, %v695
    %v840 = vpack.c.b16 %v704, %v696
    %v841 = vpack.c.b16 %v705, %v697
    %v842 = vpack.c.b16 %v714, %v706
    %v843 = vpack.c.b16 %v715, %v707
    %v844 = vpack.c.b16 %v716, %v708
    %v845 = vpack.c.b16 %v717, %v709
    %v846 = vpack.c.b16 %v718, %v710
    %v847 = vpack.c.b16 %v719, %v711
    %v848 = vpack.c.b16 %v720, %v712
    %v849 = vpack.c.b16 %v721, %v713
    %978 = vmatprep.subr.bf16.mxu0 %v723
    %979 = vmatpush1.bf16.msra.mxu0 %v722
    %980 = vmatprep.subr.bf16.mxu0 %v731
    %981 = vmatpush1.bf16.msra.mxu0 %v730
    %982 = vmatprep.subr.bf16.mxu0 %v739
    %983 = vmatpush1.bf16.msra.mxu0 %v738
    %984 = vmatprep.subr.bf16.mxu0 %v747
    %985 = vmatpush1.bf16.msra.mxu0 %v746
    %986 = vmatprep.subr.bf16.mxu0 %v755
    %987 = vmatpush1.bf16.msra.mxu0 %v754
    %988 = vmatprep.subr.bf16.mxu0 %v763
    %989 = vmatpush1.bf16.msra.mxu0 %v762
    %990 = vmatprep.subr.bf16.mxu0 %v771
    %991 = vmatpush1.bf16.msra.mxu0 %v770
    %992 = vmatprep.subr.bf16.mxu0 %v779
    %993 = vmatpush1.bf16.msra.mxu0 %v778
    %994 = vmatprep.subr.bf16.mxu0 %v787
    %995 = vmatpush1.bf16.msra.mxu0 %v786
    %996 = vmatprep.subr.bf16.mxu0 %v795
    %997 = vmatpush1.bf16.msra.mxu0 %v794
    %998 = vmatprep.subr.bf16.mxu0 %v803
    %999 = vmatpush1.bf16.msra.mxu0 %v802
    %1000 = vmatprep.subr.bf16.mxu0 %v811
    %1001 = vmatpush1.bf16.msra.mxu0 %v810
    %1002 = vmatprep.subr.bf16.mxu0 %v819
    %1003 = vmatpush1.bf16.msra.mxu0 %v818
    %1004 = vmatprep.subr.bf16.mxu0 %v827
    %1005 = vmatpush1.bf16.msra.mxu0 %v826
    %1006 = vmatprep.subr.bf16.mxu0 %v835
    %1007 = vmatpush1.bf16.msra.mxu0 %v834
    %1008 = vmatprep.subr.bf16.mxu0 %v843
    %1009 = vmatpush1.bf16.msra.mxu0 %v842
    %1010 = vmatprep.mubr.bf16.mxu0 %v167
    %1011 = vmatmul.mubr.bf16.gmra.mrb[0].mxu0 %v166
    %v1012 = vpop.f32.mrb[0].mxu0
    %v1013 = vadd.f32 %v301, %v1012
    %v1014 = vpop.f32.mrb[0].mxu0
    %v1015 = vadd.f32 %v305, %v1014
    %v1016 = vpop.f32.mrb[0].mxu0
    %v1017 = vpop.f32.mrb[0].mxu0
    %1018 = vdwg.mxu0
    %1019 = vmatprep.subr.bf16.mxu0 %v725
    %1020 = vmatpush1.bf16.msra.mxu0 %v724
    %1021 = vmatprep.subr.bf16.mxu0 %v733
    %1022 = vmatpush1.bf16.msra.mxu0 %v732
    %1023 = vmatprep.subr.bf16.mxu0 %v741
    %1024 = vmatpush1.bf16.msra.mxu0 %v740
    %1025 = vmatprep.subr.bf16.mxu0 %v749
    %1026 = vmatpush1.bf16.msra.mxu0 %v748
    %1027 = vmatprep.subr.bf16.mxu0 %v757
    %1028 = vmatpush1.bf16.msra.mxu0 %v756
    %1029 = vmatprep.subr.bf16.mxu0 %v765
    %1030 = vmatpush1.bf16.msra.mxu0 %v764
    %1031 = vmatprep.subr.bf16.mxu0 %v773
    %1032 = vmatpush1.bf16.msra.mxu0 %v772
    %1033 = vmatprep.subr.bf16.mxu0 %v781
    %1034 = vmatpush1.bf16.msra.mxu0 %v780
    %1035 = vmatprep.subr.bf16.mxu0 %v789
    %1036 = vmatpush1.bf16.msra.mxu0 %v788
    %1037 = vmatprep.subr.bf16.mxu0 %v797
    %1038 = vmatpush1.bf16.msra.mxu0 %v796
    %1039 = vmatprep.subr.bf16.mxu0 %v805
    %1040 = vmatpush1.bf16.msra.mxu0 %v804
    %1041 = vmatprep.subr.bf16.mxu0 %v813
    %1042 = vmatpush1.bf16.msra.mxu0 %v812
    %1043 = vmatprep.subr.bf16.mxu0 %v821
    %1044 = vmatpush1.bf16.msra.mxu0 %v820
    %1045 = vmatprep.subr.bf16.mxu0 %v829
    %1046 = vmatpush1.bf16.msra.mxu0 %v828
    %1047 = vmatprep.subr.bf16.mxu0 %v837
    %1048 = vmatpush1.bf16.msra.mxu0 %v836
    %1049 = vmatprep.subr.bf16.mxu0 %v845
    %1050 = vmatpush1.bf16.msra.mxu0 %v844
    %1051 = vmatprep.mubr.bf16.mxu0 %v167
    %1052 = vmatmul.mubr.bf16.gmra.mrb[0].mxu0 %v166
    %v1053 = vpop.f32.mrb[0].mxu0
    %v1054 = vadd.f32 %v309, %v1053
    %v1055 = vpop.f32.mrb[0].mxu0
    %v1056 = vadd.f32 %v313, %v1055
    %v1057 = vpop.f32.mrb[0].mxu0
    %v1058 = vpop.f32.mrb[0].mxu0
    %1059 = vdwg.mxu0
    %1060 = vmatprep.subr.bf16.mxu0 %v727
    %1061 = vmatpush1.bf16.msra.mxu0 %v726
    %1062 = vmatprep.subr.bf16.mxu0 %v735
    %1063 = vmatpush1.bf16.msra.mxu0 %v734
    %1064 = vmatprep.subr.bf16.mxu0 %v743
    %1065 = vmatpush1.bf16.msra.mxu0 %v742
    %1066 = vmatprep.subr.bf16.mxu0 %v751
    %1067 = vmatpush1.bf16.msra.mxu0 %v750
    %1068 = vmatprep.subr.bf16.mxu0 %v759
    %1069 = vmatpush1.bf16.msra.mxu0 %v758
    %1070 = vmatprep.subr.bf16.mxu0 %v767
    %1071 = vmatpush1.bf16.msra.mxu0 %v766
    %1072 = vmatprep.subr.bf16.mxu0 %v775
    %1073 = vmatpush1.bf16.msra.mxu0 %v774
    %1074 = vmatprep.subr.bf16.mxu0 %v783
    %1075 = vmatpush1.bf16.msra.mxu0 %v782
    %1076 = vmatprep.subr.bf16.mxu0 %v791
    %1077 = vmatpush1.bf16.msra.mxu0 %v790
    %1078 = vmatprep.subr.bf16.mxu0 %v799
    %1079 = vmatpush1.bf16.msra.mxu0 %v798
    %1080 = vmatprep.subr.bf16.mxu0 %v807
    %1081 = vmatpush1.bf16.msra.mxu0 %v806
    %1082 = vmatprep.subr.bf16.mxu0 %v815
    %1083 = vmatpush1.bf16.msra.mxu0 %v814
    %1084 = vmatprep.subr.bf16.mxu0 %v823
    %1085 = vmatpush1.bf16.msra.mxu0 %v822
    %1086 = vmatprep.subr.bf16.mxu0 %v831
    %1087 = vmatpush1.bf16.msra.mxu0 %v830
    %1088 = vmatprep.subr.bf16.mxu0 %v839
    %1089 = vmatpush1.bf16.msra.mxu0 %v838
    %1090 = vmatprep.subr.bf16.mxu0 %v847
    %1091 = vmatpush1.bf16.msra.mxu0 %v846
    %1092 = vmatprep.mubr.bf16.mxu0 %v167
    %1093 = vmatmul.mubr.bf16.gmra.mrb[0].mxu0 %v166
    %v1094 = vpop.f32.mrb[0].mxu0
    %v1095 = vadd.f32 %v317, %v1094
    %v1096 = vpop.f32.mrb[0].mxu0
    %v1097 = vadd.f32 %v321, %v1096
    %v1098 = vpop.f32.mrb[0].mxu0
    %v1099 = vpop.f32.mrb[0].mxu0
    %1100 = vdwg.mxu0
    %1101 = vmatprep.subr.bf16.mxu0 %v729
    %1102 = vmatpush1.bf16.msra.mxu0 %v728
    %1103 = vmatprep.subr.bf16.mxu0 %v737
    %1104 = vmatpush1.bf16.msra.mxu0 %v736
    %1105 = vmatprep.subr.bf16.mxu0 %v745
    %1106 = vmatpush1.bf16.msra.mxu0 %v744
    %1107 = vmatprep.subr.bf16.mxu0 %v753
    %1108 = vmatpush1.bf16.msra.mxu0 %v752
    %1109 = vmatprep.subr.bf16.mxu0 %v761
    %1110 = vmatpush1.bf16.msra.mxu0 %v760
    %1111 = vmatprep.subr.bf16.mxu0 %v769
    %1112 = vmatpush1.bf16.msra.mxu0 %v768
    %1113 = vmatprep.subr.bf16.mxu0 %v777
    %1114 = vmatpush1.bf16.msra.mxu0 %v776
    %1115 = vmatprep.subr.bf16.mxu0 %v785
    %1116 = vmatpush1.bf16.msra.mxu0 %v784
    %1117 = vmatprep.subr.bf16.mxu0 %v793
    %1118 = vmatpush1.bf16.msra.mxu0 %v792
    %1119 = vmatprep.subr.bf16.mxu0 %v801
    %1120 = vmatpush1.bf16.msra.mxu0 %v800
    %1121 = vmatprep.subr.bf16.mxu0 %v809
    %1122 = vmatpush1.bf16.msra.mxu0 %v808
    %1123 = vmatprep.subr.bf16.mxu0 %v817
    %1124 = vmatpush1.bf16.msra.mxu0 %v816
    %1125 = vmatprep.subr.bf16.mxu0 %v825
    %1126 = vmatpush1.bf16.msra.mxu0 %v824
    %1127 = vmatprep.subr.bf16.mxu0 %v833
    %1128 = vmatpush1.bf16.msra.mxu0 %v832
    %1129 = vmatprep.subr.bf16.mxu0 %v841
    %1130 = vmatpush1.bf16.msra.mxu0 %v840
    %1131 = vmatprep.subr.bf16.mxu0 %v849
    %1132 = vmatpush1.bf16.msra.mxu0 %v848
    %1133 = vmatprep.mubr.bf16.mxu0 %v167
    %1134 = vmatmul.mubr.bf16.gmra.mrb[0].mxu0 %v166
    %v1135 = vpop.f32.mrb[0].mxu0
    %v1136 = vadd.f32 %v325, %v1135
    %v1137 = vpop.f32.mrb[0].mxu0
    %v1138 = vadd.f32 %v329, %v1137
    %v1139 = vpop.f32.mrb[0].mxu0
    %v1140 = vpop.f32.mrb[0].mxu0
    %1141 = vdwg.mxu0
    %v1142 = vmax.f32 %v1013, 0.0
    %v1143 = vmax.f32 %v1015, 0.0
    %v1144 = vmax.f32 %v1054, 0.0
    %v1145 = vmax.f32 %v1056, 0.0
    %v1146 = vmax.f32 %v1095, 0.0
    %v1147 = vmax.f32 %v1097, 0.0
    %v1148 = vmax.f32 %v1136, 0.0
    %v1149 = vmax.f32 %v1138, 0.0
    %v1150 = vpack.c.bf16 %v1142, %v1142
    %v1151 = vpack.c.bf16 %v1143, %v1143
    %v1152 = vpack.c.bf16 %v1144, %v1144
    %v1153 = vpack.c.bf16 %v1145, %v1145
    %v1154 = vpack.c.bf16 %v1146, %v1146
    %v1155 = vpack.c.bf16 %v1147, %v1147
    %v1156 = vpack.c.bf16 %v1148, %v1148
    %v1157 = vpack.c.bf16 %v1149, %v1149
    %v1158 = vld [vmem:[#allocation4] sm:$0xff]
    %v1159 = vld [vmem:[#allocation4 + $0x8] sm:$0xff]
    %v1160 = vld [vmem:[#allocation4 + $0x10] sm:$0xff]
    %v1161 = vld [vmem:[#allocation4 + $0x18] sm:$0xff]
    %v1162 = vld [vmem:[#allocation4 + $0x20] sm:$0xff]
    %v1163 = vld [vmem:[#allocation4 + $0x28] sm:$0xff]
    %v1164 = vld [vmem:[#allocation4 + $0x30] sm:$0xff]
    %v1165 = vld [vmem:[#allocation4 + $0x38] sm:$0xff]
    %v1166 = vld [vmem:[#allocation4 + $0x40] sm:$0xff]
    %v1167 = vld [vmem:[#allocation4 + $0x48] sm:$0xff]
    %v1168 = vld [vmem:[#allocation4 + $0x50] sm:$0xff]
    %v1169 = vld [vmem:[#allocation4 + $0x58] sm:$0xff]
    %v1170 = vld [vmem:[#allocation4 + $0x60] sm:$0xff]
    %v1171 = vld [vmem:[#allocation4 + $0x68] sm:$0xff]
    %v1172 = vld [vmem:[#allocation4 + $0x70] sm:$0xff]
    %v1173 = vld [vmem:[#allocation4 + $0x78] sm:$0xff]
    %v1174 = vld [vmem:[#allocation4 + $0x80] sm:$0xff]
    %v1175 = vld [vmem:[#allocation4 + $0x88] sm:$0xff]
    %v1176 = vld [vmem:[#allocation4 + $0x90] sm:$0xff]
    %v1177 = vld [vmem:[#allocation4 + $0x98] sm:$0xff]
    %v1178 = vld [vmem:[#allocation4 + $0xa0] sm:$0xff]
    %v1179 = vld [vmem:[#allocation4 + $0xa8] sm:$0xff]
    %v1180 = vld [vmem:[#allocation4 + $0xb0] sm:$0xff]
    %v1181 = vld [vmem:[#allocation4 + $0xb8] sm:$0xff]
    %v1182 = vld [vmem:[#allocation4 + $0xc0] sm:$0xff]
    %v1183 = vld [vmem:[#allocation4 + $0xc8] sm:$0xff]
    %v1184 = vld [vmem:[#allocation4 + $0xd0] sm:$0xff]
    %v1185 = vld [vmem:[#allocation4 + $0xd8] sm:$0xff]
    %v1186 = vld [vmem:[#allocation4 + $0xe0] sm:$0xff]
    %v1187 = vld [vmem:[#allocation4 + $0xe8] sm:$0xff]
    %v1188 = vld [vmem:[#allocation4 + $0xf0] sm:$0xff]
    %v1189 = vld [vmem:[#allocation4 + $0xf8] sm:$0xff]
    %v1190 = vld [vmem:[#allocation4 + $0x100] sm:$0xff]
    %v1191 = vld [vmem:[#allocation4 + $0x108] sm:$0xff]
    %v1192 = vld [vmem:[#allocation4 + $0x110] sm:$0xff]
    %v1193 = vld [vmem:[#allocation4 + $0x118] sm:$0xff]
    %v1194 = vld [vmem:[#allocation4 + $0x120] sm:$0xff]
    %v1195 = vld [vmem:[#allocation4 + $0x128] sm:$0xff]
    %v1196 = vld [vmem:[#allocation4 + $0x130] sm:$0xff]
    %v1197 = vld [vmem:[#allocation4 + $0x138] sm:$0xff]
    %v1198 = vld [vmem:[#allocation4 + $0x140] sm:$0xff]
    %v1199 = vld [vmem:[#allocation4 + $0x148] sm:$0xff]
    %v1200 = vld [vmem:[#allocation4 + $0x150] sm:$0xff]
    %v1201 = vld [vmem:[#allocation4 + $0x158] sm:$0xff]
    %v1202 = vld [vmem:[#allocation4 + $0x160] sm:$0xff]
    %v1203 = vld [vmem:[#allocation4 + $0x168] sm:$0xff]
    %v1204 = vld [vmem:[#allocation4 + $0x170] sm:$0xff]
    %v1205 = vld [vmem:[#allocation4 + $0x178] sm:$0xff]
    %v1206 = vld [vmem:[#allocation4 + $0x180] sm:$0xff]
    %v1207 = vld [vmem:[#allocation4 + $0x188] sm:$0xff]
    %v1208 = vld [vmem:[#allocation4 + $0x190] sm:$0xff]
    %v1209 = vld [vmem:[#allocation4 + $0x198] sm:$0xff]
    %v1210 = vld [vmem:[#allocation4 + $0x1a0] sm:$0xff]
    %v1211 = vld [vmem:[#allocation4 + $0x1a8] sm:$0xff]
    %v1212 = vld [vmem:[#allocation4 + $0x1b0] sm:$0xff]
    %v1213 = vld [vmem:[#allocation4 + $0x1b8] sm:$0xff]
    %v1214 = vld [vmem:[#allocation4 + $0x1c0] sm:$0xff]
    %v1215 = vld [vmem:[#allocation4 + $0x1c8] sm:$0xff]
    %v1216 = vld [vmem:[#allocation4 + $0x1d0] sm:$0xff]
    %v1217 = vld [vmem:[#allocation4 + $0x1d8] sm:$0xff]
    %v1218 = vld [vmem:[#allocation4 + $0x1e0] sm:$0xff]
    %v1219 = vld [vmem:[#allocation4 + $0x1e8] sm:$0xff]
    %v1220 = vld [vmem:[#allocation4 + $0x1f0] sm:$0xff]
    %v1221 = vld [vmem:[#allocation4 + $0x1f8] sm:$0xff]
    %v1222 = vld [vmem:[#allocation4 + $0x200] sm:$0xff]
    %v1223 = vld [vmem:[#allocation4 + $0x208] sm:$0xff]
    %v1224 = vld [vmem:[#allocation4 + $0x210] sm:$0xff]
    %v1225 = vld [vmem:[#allocation4 + $0x218] sm:$0xff]
    %v1226 = vld [vmem:[#allocation4 + $0x220] sm:$0xff]
    %v1227 = vld [vmem:[#allocation4 + $0x228] sm:$0xff]
    %v1228 = vld [vmem:[#allocation4 + $0x230] sm:$0xff]
    %v1229 = vld [vmem:[#allocation4 + $0x238] sm:$0xff]
    %v1230 = vld [vmem:[#allocation4 + $0x240] sm:$0xff]
    %v1231 = vld [vmem:[#allocation4 + $0x248] sm:$0xff]
    %v1232 = vld [vmem:[#allocation4 + $0x250] sm:$0xff]
    %v1233 = vld [vmem:[#allocation4 + $0x258] sm:$0xff]
    %v1234 = vld [vmem:[#allocation4 + $0x260] sm:$0xff]
    %v1235 = vld [vmem:[#allocation4 + $0x268] sm:$0xff]
    %v1236 = vld [vmem:[#allocation4 + $0x270] sm:$0xff]
    %v1237 = vld [vmem:[#allocation4 + $0x278] sm:$0xff]
    %v1238 = vld [vmem:[#allocation4 + $0x280] sm:$0xff]
    %v1239 = vld [vmem:[#allocation4 + $0x288] sm:$0xff]
    %v1240 = vld [vmem:[#allocation4 + $0x290] sm:$0xff]
    %v1241 = vld [vmem:[#allocation4 + $0x298] sm:$0xff]
    %v1242 = vld [vmem:[#allocation4 + $0x2a0] sm:$0xff]
    %v1243 = vld [vmem:[#allocation4 + $0x2a8] sm:$0xff]
    %v1244 = vld [vmem:[#allocation4 + $0x2b0] sm:$0xff]
    %v1245 = vld [vmem:[#allocation4 + $0x2b8] sm:$0xff]
    %v1246 = vld [vmem:[#allocation4 + $0x2c0] sm:$0xff]
    %v1247 = vld [vmem:[#allocation4 + $0x2c8] sm:$0xff]
    %v1248 = vld [vmem:[#allocation4 + $0x2d0] sm:$0xff]
    %v1249 = vld [vmem:[#allocation4 + $0x2d8] sm:$0xff]
    %v1250 = vld [vmem:[#allocation4 + $0x2e0] sm:$0xff]
    %v1251 = vld [vmem:[#allocation4 + $0x2e8] sm:$0xff]
    %v1252 = vld [vmem:[#allocation4 + $0x2f0] sm:$0xff]
    %v1253 = vld [vmem:[#allocation4 + $0x2f8] sm:$0xff]
    %v1254 = vld [vmem:[#allocation4 + $0x300] sm:$0xff]
    %v1255 = vld [vmem:[#allocation4 + $0x308] sm:$0xff]
    %v1256 = vld [vmem:[#allocation4 + $0x310] sm:$0xff]
    %v1257 = vld [vmem:[#allocation4 + $0x318] sm:$0xff]
    %v1258 = vld [vmem:[#allocation4 + $0x320] sm:$0xff]
    %v1259 = vld [vmem:[#allocation4 + $0x328] sm:$0xff]
    %v1260 = vld [vmem:[#allocation4 + $0x330] sm:$0xff]
    %v1261 = vld [vmem:[#allocation4 + $0x338] sm:$0xff]
    %v1262 = vld [vmem:[#allocation4 + $0x340] sm:$0xff]
    %v1263 = vld [vmem:[#allocation4 + $0x348] sm:$0xff]
    %v1264 = vld [vmem:[#allocation4 + $0x350] sm:$0xff]
    %v1265 = vld [vmem:[#allocation4 + $0x358] sm:$0xff]
    %v1266 = vld [vmem:[#allocation4 + $0x360] sm:$0xff]
    %v1267 = vld [vmem:[#allocation4 + $0x368] sm:$0xff]
    %v1268 = vld [vmem:[#allocation4 + $0x370] sm:$0xff]
    %v1269 = vld [vmem:[#allocation4 + $0x378] sm:$0xff]
    %v1270 = vld [vmem:[#allocation4 + $0x380] sm:$0xff]
    %v1271 = vld [vmem:[#allocation4 + $0x388] sm:$0xff]
    %v1272 = vld [vmem:[#allocation4 + $0x390] sm:$0xff]
    %v1273 = vld [vmem:[#allocation4 + $0x398] sm:$0xff]
    %v1274 = vld [vmem:[#allocation4 + $0x3a0] sm:$0xff]
    %v1275 = vld [vmem:[#allocation4 + $0x3a8] sm:$0xff]
    %v1276 = vld [vmem:[#allocation4 + $0x3b0] sm:$0xff]
    %v1277 = vld [vmem:[#allocation4 + $0x3b8] sm:$0xff]
    %v1278 = vld [vmem:[#allocation4 + $0x3c0] sm:$0xff]
    %v1279 = vld [vmem:[#allocation4 + $0x3c8] sm:$0xff]
    %v1280 = vld [vmem:[#allocation4 + $0x3d0] sm:$0xff]
    %v1281 = vld [vmem:[#allocation4 + $0x3d8] sm:$0xff]
    %v1282 = vld [vmem:[#allocation4 + $0x3e0] sm:$0xff]
    %v1283 = vld [vmem:[#allocation4 + $0x3e8] sm:$0xff]
    %v1284 = vld [vmem:[#allocation4 + $0x3f0] sm:$0xff]
    %v1285 = vld [vmem:[#allocation4 + $0x3f8] sm:$0xff]
    %v1286 = vld [vmem:[%s6] sm:$0x3]
    %v1288 = vlaneseq
    %v1289 = vshrl.u32 %v1288, 7
    %v1290 = vsub.s32 0, %v1289
    %v1291 = vrot.slane %v1286, %v1290
    %v1292 = vlaneseq
    %v1293 = vshrl.u32 %v1292, 7
    %v1294 = vsub.s32 1, %v1293
    %v1295 = vrot.slane %v1286, %v1294
    %v1426 = vunpack.c.l.b16 %v1158
    %v1427 = vunpack.c.h.b16 %v1158
    %v1428 = vunpack.c.l.b16 %v1159
    %v1429 = vunpack.c.h.b16 %v1159
    %v1430 = vunpack.c.l.b16 %v1160
    %v1431 = vunpack.c.h.b16 %v1160
    %v1432 = vunpack.c.l.b16 %v1161
    %v1433 = vunpack.c.h.b16 %v1161
    %v1434 = vunpack.c.l.b16 %v1162
    %v1435 = vunpack.c.h.b16 %v1162
    %v1436 = vunpack.c.l.b16 %v1163
    %v1437 = vunpack.c.h.b16 %v1163
    %v1438 = vunpack.c.l.b16 %v1164
    %v1439 = vunpack.c.h.b16 %v1164
    %v1440 = vunpack.c.l.b16 %v1165
    %v1441 = vunpack.c.h.b16 %v1165
    %v1442 = vunpack.c.l.b16 %v1166
    %v1443 = vunpack.c.h.b16 %v1166
    %v1444 = vunpack.c.l.b16 %v1167
    %v1445 = vunpack.c.h.b16 %v1167
    %v1446 = vunpack.c.l.b16 %v1168
    %v1447 = vunpack.c.h.b16 %v1168
    %v1448 = vunpack.c.l.b16 %v1169
    %v1449 = vunpack.c.h.b16 %v1169
    %v1450 = vunpack.c.l.b16 %v1170
    %v1451 = vunpack.c.h.b16 %v1170
    %v1452 = vunpack.c.l.b16 %v1171
    %v1453 = vunpack.c.h.b16 %v1171
    %v1454 = vunpack.c.l.b16 %v1172
    %v1455 = vunpack.c.h.b16 %v1172
    %v1456 = vunpack.c.l.b16 %v1173
    %v1457 = vunpack.c.h.b16 %v1173
    %v1458 = vunpack.c.l.b16 %v1174
    %v1459 = vunpack.c.h.b16 %v1174
    %v1460 = vunpack.c.l.b16 %v1175
    %v1461 = vunpack.c.h.b16 %v1175
    %v1462 = vunpack.c.l.b16 %v1176
    %v1463 = vunpack.c.h.b16 %v1176
    %v1464 = vunpack.c.l.b16 %v1177
    %v1465 = vunpack.c.h.b16 %v1177
    %v1466 = vunpack.c.l.b16 %v1178
    %v1467 = vunpack.c.h.b16 %v1178
    %v1468 = vunpack.c.l.b16 %v1179
    %v1469 = vunpack.c.h.b16 %v1179
    %v1470 = vunpack.c.l.b16 %v1180
    %v1471 = vunpack.c.h.b16 %v1180
    %v1472 = vunpack.c.l.b16 %v1181
    %v1473 = vunpack.c.h.b16 %v1181
    %v1474 = vunpack.c.l.b16 %v1182
    %v1475 = vunpack.c.h.b16 %v1182
    %v1476 = vunpack.c.l.b16 %v1183
    %v1477 = vunpack.c.h.b16 %v1183
    %v1478 = vunpack.c.l.b16 %v1184
    %v1479 = vunpack.c.h.b16 %v1184
    %v1480 = vunpack.c.l.b16 %v1185
    %v1481 = vunpack.c.h.b16 %v1185
    %v1482 = vunpack.c.l.b16 %v1186
    %v1483 = vunpack.c.h.b16 %v1186
    %v1484 = vunpack.c.l.b16 %v1187
    %v1485 = vunpack.c.h.b16 %v1187
    %v1486 = vunpack.c.l.b16 %v1188
    %v1487 = vunpack.c.h.b16 %v1188
    %v1488 = vunpack.c.l.b16 %v1189
    %v1489 = vunpack.c.h.b16 %v1189
    %v1490 = vunpack.c.l.b16 %v1190
    %v1491 = vunpack.c.h.b16 %v1190
    %v1492 = vunpack.c.l.b16 %v1191
    %v1493 = vunpack.c.h.b16 %v1191
    %v1494 = vunpack.c.l.b16 %v1192
    %v1495 = vunpack.c.h.b16 %v1192
    %v1496 = vunpack.c.l.b16 %v1193
    %v1497 = vunpack.c.h.b16 %v1193
    %v1498 = vunpack.c.l.b16 %v1194
    %v1499 = vunpack.c.h.b16 %v1194
    %v1500 = vunpack.c.l.b16 %v1195
    %v1501 = vunpack.c.h.b16 %v1195
    %v1502 = vunpack.c.l.b16 %v1196
    %v1503 = vunpack.c.h.b16 %v1196
    %v1504 = vunpack.c.l.b16 %v1197
    %v1505 = vunpack.c.h.b16 %v1197
    %v1506 = vunpack.c.l.b16 %v1198
    %v1507 = vunpack.c.h.b16 %v1198
    %v1508 = vunpack.c.l.b16 %v1199
    %v1509 = vunpack.c.h.b16 %v1199
    %v1510 = vunpack.c.l.b16 %v1200
    %v1511 = vunpack.c.h.b16 %v1200
    %v1512 = vunpack.c.l.b16 %v1201
    %v1513 = vunpack.c.h.b16 %v1201
    %v1514 = vunpack.c.l.b16 %v1202
    %v1515 = vunpack.c.h.b16 %v1202
    %v1516 = vunpack.c.l.b16 %v1203
    %v1517 = vunpack.c.h.b16 %v1203
    %v1518 = vunpack.c.l.b16 %v1204
    %v1519 = vunpack.c.h.b16 %v1204
    %v1520 = vunpack.c.l.b16 %v1205
    %v1521 = vunpack.c.h.b16 %v1205
    %v1522 = vunpack.c.l.b16 %v1206
    %v1523 = vunpack.c.h.b16 %v1206
    %v1524 = vunpack.c.l.b16 %v1207
    %v1525 = vunpack.c.h.b16 %v1207
    %v1526 = vunpack.c.l.b16 %v1208
    %v1527 = vunpack.c.h.b16 %v1208
    %v1528 = vunpack.c.l.b16 %v1209
    %v1529 = vunpack.c.h.b16 %v1209
    %v1530 = vunpack.c.l.b16 %v1210
    %v1531 = vunpack.c.h.b16 %v1210
    %v1532 = vunpack.c.l.b16 %v1211
    %v1533 = vunpack.c.h.b16 %v1211
    %v1534 = vunpack.c.l.b16 %v1212
    %v1535 = vunpack.c.h.b16 %v1212
    %v1536 = vunpack.c.l.b16 %v1213
    %v1537 = vunpack.c.h.b16 %v1213
    %v1538 = vunpack.c.l.b16 %v1214
    %v1539 = vunpack.c.h.b16 %v1214
    %v1540 = vunpack.c.l.b16 %v1215
    %v1541 = vunpack.c.h.b16 %v1215
    %v1542 = vunpack.c.l.b16 %v1216
    %v1543 = vunpack.c.h.b16 %v1216
    %v1544 = vunpack.c.l.b16 %v1217
    %v1545 = vunpack.c.h.b16 %v1217
    %v1546 = vunpack.c.l.b16 %v1218
    %v1547 = vunpack.c.h.b16 %v1218
    %v1548 = vunpack.c.l.b16 %v1219
    %v1549 = vunpack.c.h.b16 %v1219
    %v1550 = vunpack.c.l.b16 %v1220
    %v1551 = vunpack.c.h.b16 %v1220
    %v1552 = vunpack.c.l.b16 %v1221
    %v1553 = vunpack.c.h.b16 %v1221
    %v1554 = vunpack.c.l.b16 %v1222
    %v1555 = vunpack.c.h.b16 %v1222
    %v1556 = vunpack.c.l.b16 %v1223
    %v1557 = vunpack.c.h.b16 %v1223
    %v1558 = vunpack.c.l.b16 %v1224
    %v1559 = vunpack.c.h.b16 %v1224
    %v1560 = vunpack.c.l.b16 %v1225
    %v1561 = vunpack.c.h.b16 %v1225
    %v1562 = vunpack.c.l.b16 %v1226
    %v1563 = vunpack.c.h.b16 %v1226
    %v1564 = vunpack.c.l.b16 %v1227
    %v1565 = vunpack.c.h.b16 %v1227
    %v1566 = vunpack.c.l.b16 %v1228
    %v1567 = vunpack.c.h.b16 %v1228
    %v1568 = vunpack.c.l.b16 %v1229
    %v1569 = vunpack.c.h.b16 %v1229
    %v1570 = vunpack.c.l.b16 %v1230
    %v1571 = vunpack.c.h.b16 %v1230
    %v1572 = vunpack.c.l.b16 %v1231
    %v1573 = vunpack.c.h.b16 %v1231
    %v1574 = vunpack.c.l.b16 %v1232
    %v1575 = vunpack.c.h.b16 %v1232
    %v1576 = vunpack.c.l.b16 %v1233
    %v1577 = vunpack.c.h.b16 %v1233
    %v1578 = vunpack.c.l.b16 %v1234
    %v1579 = vunpack.c.h.b16 %v1234
    %v1580 = vunpack.c.l.b16 %v1235
    %v1581 = vunpack.c.h.b16 %v1235
    %v1582 = vunpack.c.l.b16 %v1236
    %v1583 = vunpack.c.h.b16 %v1236
    %v1584 = vunpack.c.l.b16 %v1237
    %v1585 = vunpack.c.h.b16 %v1237
    %v1586 = vunpack.c.l.b16 %v1238
    %v1587 = vunpack.c.h.b16 %v1238
    %v1588 = vunpack.c.l.b16 %v1239
    %v1589 = vunpack.c.h.b16 %v1239
    %v1590 = vunpack.c.l.b16 %v1240
    %v1591 = vunpack.c.h.b16 %v1240
    %v1592 = vunpack.c.l.b16 %v1241
    %v1593 = vunpack.c.h.b16 %v1241
    %v1594 = vunpack.c.l.b16 %v1242
    %v1595 = vunpack.c.h.b16 %v1242
    %v1596 = vunpack.c.l.b16 %v1243
    %v1597 = vunpack.c.h.b16 %v1243
    %v1598 = vunpack.c.l.b16 %v1244
    %v1599 = vunpack.c.h.b16 %v1244
    %v1600 = vunpack.c.l.b16 %v1245
    %v1601 = vunpack.c.h.b16 %v1245
    %v1602 = vunpack.c.l.b16 %v1246
    %v1603 = vunpack.c.h.b16 %v1246
    %v1604 = vunpack.c.l.b16 %v1247
    %v1605 = vunpack.c.h.b16 %v1247
    %v1606 = vunpack.c.l.b16 %v1248
    %v1607 = vunpack.c.h.b16 %v1248
    %v1608 = vunpack.c.l.b16 %v1249
    %v1609 = vunpack.c.h.b16 %v1249
    %v1610 = vunpack.c.l.b16 %v1250
    %v1611 = vunpack.c.h.b16 %v1250
    %v1612 = vunpack.c.l.b16 %v1251
    %v1613 = vunpack.c.h.b16 %v1251
    %v1614 = vunpack.c.l.b16 %v1252
    %v1615 = vunpack.c.h.b16 %v1252
    %v1616 = vunpack.c.l.b16 %v1253
    %v1617 = vunpack.c.h.b16 %v1253
    %v1618 = vunpack.c.l.b16 %v1254
    %v1619 = vunpack.c.h.b16 %v1254
    %v1620 = vunpack.c.l.b16 %v1255
    %v1621 = vunpack.c.h.b16 %v1255
    %v1622 = vunpack.c.l.b16 %v1256
    %v1623 = vunpack.c.h.b16 %v1256
    %v1624 = vunpack.c.l.b16 %v1257
    %v1625 = vunpack.c.h.b16 %v1257
    %v1626 = vunpack.c.l.b16 %v1258
    %v1627 = vunpack.c.h.b16 %v1258
    %v1628 = vunpack.c.l.b16 %v1259
    %v1629 = vunpack.c.h.b16 %v1259
    %v1630 = vunpack.c.l.b16 %v1260
    %v1631 = vunpack.c.h.b16 %v1260
    %v1632 = vunpack.c.l.b16 %v1261
    %v1633 = vunpack.c.h.b16 %v1261
    %v1634 = vunpack.c.l.b16 %v1262
    %v1635 = vunpack.c.h.b16 %v1262
    %v1636 = vunpack.c.l.b16 %v1263
    %v1637 = vunpack.c.h.b16 %v1263
    %v1638 = vunpack.c.l.b16 %v1264
    %v1639 = vunpack.c.h.b16 %v1264
    %v1640 = vunpack.c.l.b16 %v1265
    %v1641 = vunpack.c.h.b16 %v1265
    %v1642 = vunpack.c.l.b16 %v1266
    %v1643 = vunpack.c.h.b16 %v1266
    %v1644 = vunpack.c.l.b16 %v1267
    %v1645 = vunpack.c.h.b16 %v1267
    %v1646 = vunpack.c.l.b16 %v1268
    %v1647 = vunpack.c.h.b16 %v1268
    %v1648 = vunpack.c.l.b16 %v1269
    %v1649 = vunpack.c.h.b16 %v1269
    %v1650 = vunpack.c.l.b16 %v1270
    %v1651 = vunpack.c.h.b16 %v1270
    %v1652 = vunpack.c.l.b16 %v1271
    %v1653 = vunpack.c.h.b16 %v1271
    %v1654 = vunpack.c.l.b16 %v1272
    %v1655 = vunpack.c.h.b16 %v1272
    %v1656 = vunpack.c.l.b16 %v1273
    %v1657 = vunpack.c.h.b16 %v1273
    %v1658 = vunpack.c.l.b16 %v1274
    %v1659 = vunpack.c.h.b16 %v1274
    %v1660 = vunpack.c.l.b16 %v1275
    %v1661 = vunpack.c.h.b16 %v1275
    %v1662 = vunpack.c.l.b16 %v1276
    %v1663 = vunpack.c.h.b16 %v1276
    %v1664 = vunpack.c.l.b16 %v1277
    %v1665 = vunpack.c.h.b16 %v1277
    %v1666 = vunpack.c.l.b16 %v1278
    %v1667 = vunpack.c.h.b16 %v1278
    %v1668 = vunpack.c.l.b16 %v1279
    %v1669 = vunpack.c.h.b16 %v1279
    %v1670 = vunpack.c.l.b16 %v1280
    %v1671 = vunpack.c.h.b16 %v1280
    %v1672 = vunpack.c.l.b16 %v1281
    %v1673 = vunpack.c.h.b16 %v1281
    %v1674 = vunpack.c.l.b16 %v1282
    %v1675 = vunpack.c.h.b16 %v1282
    %v1676 = vunpack.c.l.b16 %v1283
    %v1677 = vunpack.c.h.b16 %v1283
    %v1678 = vunpack.c.l.b16 %v1284
    %v1679 = vunpack.c.h.b16 %v1284
    %v1680 = vunpack.c.l.b16 %v1285
    %v1681 = vunpack.c.h.b16 %v1285
    %v1682 = vpack.c.b16 %v1428, %v1426
    %v1683 = vpack.c.b16 %v1429, %v1427
    %v1684 = vpack.c.b16 %v1432, %v1430
    %v1685 = vpack.c.b16 %v1433, %v1431
    %v1686 = vpack.c.b16 %v1436, %v1434
    %v1687 = vpack.c.b16 %v1437, %v1435
    %v1688 = vpack.c.b16 %v1440, %v1438
    %v1689 = vpack.c.b16 %v1441, %v1439
    %v1690 = vpack.c.b16 %v1444, %v1442
    %v1691 = vpack.c.b16 %v1445, %v1443
    %v1692 = vpack.c.b16 %v1448, %v1446
    %v1693 = vpack.c.b16 %v1449, %v1447
    %v1694 = vpack.c.b16 %v1452, %v1450
    %v1695 = vpack.c.b16 %v1453, %v1451
    %v1696 = vpack.c.b16 %v1456, %v1454
    %v1697 = vpack.c.b16 %v1457, %v1455
    %v1698 = vpack.c.b16 %v1460, %v1458
    %v1699 = vpack.c.b16 %v1461, %v1459
    %v1700 = vpack.c.b16 %v1464, %v1462
    %v1701 = vpack.c.b16 %v1465, %v1463
    %v1702 = vpack.c.b16 %v1468, %v1466
    %v1703 = vpack.c.b16 %v1469, %v1467
    %v1704 = vpack.c.b16 %v1472, %v1470
    %v1705 = vpack.c.b16 %v1473, %v1471
    %v1706 = vpack.c.b16 %v1476, %v1474
    %v1707 = vpack.c.b16 %v1477, %v1475
    %v1708 = vpack.c.b16 %v1480, %v1478
    %v1709 = vpack.c.b16 %v1481, %v1479
    %v1710 = vpack.c.b16 %v1484, %v1482
    %v1711 = vpack.c.b16 %v1485, %v1483
    %v1712 = vpack.c.b16 %v1488, %v1486
    %v1713 = vpack.c.b16 %v1489, %v1487
    %v1714 = vpack.c.b16 %v1492, %v1490
    %v1715 = vpack.c.b16 %v1493, %v1491
    %v1716 = vpack.c.b16 %v1496, %v1494
    %v1717 = vpack.c.b16 %v1497, %v1495
    %v1718 = vpack.c.b16 %v1500, %v1498
    %v1719 = vpack.c.b16 %v1501, %v1499
    %v1720 = vpack.c.b16 %v1504, %v1502
    %v1721 = vpack.c.b16 %v1505, %v1503
    %v1722 = vpack.c.b16 %v1508, %v1506
    %v1723 = vpack.c.b16 %v1509, %v1507
    %v1724 = vpack.c.b16 %v1512, %v1510
    %v1725 = vpack.c.b16 %v1513, %v1511
    %v1726 = vpack.c.b16 %v1516, %v1514
    %v1727 = vpack.c.b16 %v1517, %v1515
    %v1728 = vpack.c.b16 %v1520, %v1518
    %v1729 = vpack.c.b16 %v1521, %v1519
    %v1730 = vpack.c.b16 %v1524, %v1522
    %v1731 = vpack.c.b16 %v1525, %v1523
    %v1732 = vpack.c.b16 %v1528, %v1526
    %v1733 = vpack.c.b16 %v1529, %v1527
    %v1734 = vpack.c.b16 %v1532, %v1530
    %v1735 = vpack.c.b16 %v1533, %v1531
    %v1736 = vpack.c.b16 %v1536, %v1534
    %v1737 = vpack.c.b16 %v1537, %v1535
    %v1738 = vpack.c.b16 %v1540, %v1538
    %v1739 = vpack.c.b16 %v1541, %v1539
    %v1740 = vpack.c.b16 %v1544, %v1542
    %v1741 = vpack.c.b16 %v1545, %v1543
    %v1742 = vpack.c.b16 %v1548, %v1546
    %v1743 = vpack.c.b16 %v1549, %v1547
    %v1744 = vpack.c.b16 %v1552, %v1550
    %v1745 = vpack.c.b16 %v1553, %v1551
    %v1746 = vpack.c.b16 %v1556, %v1554
    %v1747 = vpack.c.b16 %v1557, %v1555
    %v1748 = vpack.c.b16 %v1560, %v1558
    %v1749 = vpack.c.b16 %v1561, %v1559
    %v1750 = vpack.c.b16 %v1564, %v1562
    %v1751 = vpack.c.b16 %v1565, %v1563
    %v1752 = vpack.c.b16 %v1568, %v1566
    %v1753 = vpack.c.b16 %v1569, %v1567
    %v1754 = vpack.c.b16 %v1572, %v1570
    %v1755 = vpack.c.b16 %v1573, %v1571
    %v1756 = vpack.c.b16 %v1576, %v1574
    %v1757 = vpack.c.b16 %v1577, %v1575
    %v1758 = vpack.c.b16 %v1580, %v1578
    %v1759 = vpack.c.b16 %v1581, %v1579
    %v1760 = vpack.c.b16 %v1584, %v1582
    %v1761 = vpack.c.b16 %v1585, %v1583
    %v1762 = vpack.c.b16 %v1588, %v1586
    %v1763 = vpack.c.b16 %v1589, %v1587
    %v1764 = vpack.c.b16 %v1592, %v1590
    %v1765 = vpack.c.b16 %v1593, %v1591
    %v1766 = vpack.c.b16 %v1596, %v1594
    %v1767 = vpack.c.b16 %v1597, %v1595
    %v1768 = vpack.c.b16 %v1600, %v1598
    %v1769 = vpack.c.b16 %v1601, %v1599
    %v1770 = vpack.c.b16 %v1604, %v1602
    %v1771 = vpack.c.b16 %v1605, %v1603
    %v1772 = vpack.c.b16 %v1608, %v1606
    %v1773 = vpack.c.b16 %v1609, %v1607
    %v1774 = vpack.c.b16 %v1612, %v1610
    %v1775 = vpack.c.b16 %v1613, %v1611
    %v1776 = vpack.c.b16 %v1616, %v1614
    %v1777 = vpack.c.b16 %v1617, %v1615
    %v1778 = vpack.c.b16 %v1620, %v1618
    %v1779 = vpack.c.b16 %v1621, %v1619
    %v1780 = vpack.c.b16 %v1624, %v1622
    %v1781 = vpack.c.b16 %v1625, %v1623
    %v1782 = vpack.c.b16 %v1628, %v1626
    %v1783 = vpack.c.b16 %v1629, %v1627
    %v1784 = vpack.c.b16 %v1632, %v1630
    %v1785 = vpack.c.b16 %v1633, %v1631
    %v1786 = vpack.c.b16 %v1636, %v1634
    %v1787 = vpack.c.b16 %v1637, %v1635
    %v1788 = vpack.c.b16 %v1640, %v1638
    %v1789 = vpack.c.b16 %v1641, %v1639
    %v1790 = vpack.c.b16 %v1644, %v1642
    %v1791 = vpack.c.b16 %v1645, %v1643
    %v1792 = vpack.c.b16 %v1648, %v1646
    %v1793 = vpack.c.b16 %v1649, %v1647
    %v1794 = vpack.c.b16 %v1652, %v1650
    %v1795 = vpack.c.b16 %v1653, %v1651
    %v1796 = vpack.c.b16 %v1656, %v1654
    %v1797 = vpack.c.b16 %v1657, %v1655
    %v1798 = vpack.c.b16 %v1660, %v1658
    %v1799 = vpack.c.b16 %v1661, %v1659
    %v1800 = vpack.c.b16 %v1664, %v1662
    %v1801 = vpack.c.b16 %v1665, %v1663
    %v1802 = vpack.c.b16 %v1668, %v1666
    %v1803 = vpack.c.b16 %v1669, %v1667
    %v1804 = vpack.c.b16 %v1672, %v1670
    %v1805 = vpack.c.b16 %v1673, %v1671
    %v1806 = vpack.c.b16 %v1676, %v1674
    %v1807 = vpack.c.b16 %v1677, %v1675
    %v1808 = vpack.c.b16 %v1680, %v1678
    %v1809 = vpack.c.b16 %v1681, %v1679
    %1938 = vmatprep.subr.bf16.mxu0 %v1683
    %1939 = vmatpush1.bf16.msra.mxu0 %v1682
    %1940 = vmatprep.subr.bf16.mxu0 %v1685
    %1941 = vmatpush1.bf16.msra.mxu0 %v1684
    %1942 = vmatprep.subr.bf16.mxu0 %v1687
    %1943 = vmatpush1.bf16.msra.mxu0 %v1686
    %1944 = vmatprep.subr.bf16.mxu0 %v1689
    %1945 = vmatpush1.bf16.msra.mxu0 %v1688
    %1946 = vmatprep.subr.bf16.mxu0 %v1691
    %1947 = vmatpush1.bf16.msra.mxu0 %v1690
    %1948 = vmatprep.subr.bf16.mxu0 %v1693
    %1949 = vmatpush1.bf16.msra.mxu0 %v1692
    %1950 = vmatprep.subr.bf16.mxu0 %v1695
    %1951 = vmatpush1.bf16.msra.mxu0 %v1694
    %1952 = vmatprep.subr.bf16.mxu0 %v1697
    %1953 = vmatpush1.bf16.msra.mxu0 %v1696
    %1954 = vmatprep.subr.bf16.mxu0 %v1699
    %1955 = vmatpush1.bf16.msra.mxu0 %v1698
    %1956 = vmatprep.subr.bf16.mxu0 %v1701
    %1957 = vmatpush1.bf16.msra.mxu0 %v1700
    %1958 = vmatprep.subr.bf16.mxu0 %v1703
    %1959 = vmatpush1.bf16.msra.mxu0 %v1702
    %1960 = vmatprep.subr.bf16.mxu0 %v1705
    %1961 = vmatpush1.bf16.msra.mxu0 %v1704
    %1962 = vmatprep.subr.bf16.mxu0 %v1707
    %1963 = vmatpush1.bf16.msra.mxu0 %v1706
    %1964 = vmatprep.subr.bf16.mxu0 %v1709
    %1965 = vmatpush1.bf16.msra.mxu0 %v1708
    %1966 = vmatprep.subr.bf16.mxu0 %v1711
    %1967 = vmatpush1.bf16.msra.mxu0 %v1710
    %1968 = vmatprep.subr.bf16.mxu0 %v1713
    %1969 = vmatpush1.bf16.msra.mxu0 %v1712
    %1970 = vmatprep.mubr.bf16.mxu0 %v1151
    %1971 = vmatmul.mubr.bf16.gmra.mrb[0].mxu0 %v1150
    %v1972 = vpop.f32.mrb[0].mxu0
    %v1973 = vadd.f32 %v1291, %v1972
    %v1974 = vpop.f32.mrb[0].mxu0
    %v1975 = vadd.f32 %v1295, %v1974
    %v1976 = vpop.f32.mrb[0].mxu0
    %v1977 = vpop.f32.mrb[0].mxu0
    %1978 = vdwg.mxu0
    %1979 = vmatprep.subr.bf16.mxu0 %v1715
    %1980 = vmatpush1.bf16.msra.mxu0 %v1714
    %1981 = vmatprep.subr.bf16.mxu0 %v1717
    %1982 = vmatpush1.bf16.msra.mxu0 %v1716
    %1983 = vmatprep.subr.bf16.mxu0 %v1719
    %1984 = vmatpush1.bf16.msra.mxu0 %v1718
    %1985 = vmatprep.subr.bf16.mxu0 %v1721
    %1986 = vmatpush1.bf16.msra.mxu0 %v1720
    %1987 = vmatprep.subr.bf16.mxu0 %v1723
    %1988 = vmatpush1.bf16.msra.mxu0 %v1722
    %1989 = vmatprep.subr.bf16.mxu0 %v1725
    %1990 = vmatpush1.bf16.msra.mxu0 %v1724
    %1991 = vmatprep.subr.bf16.mxu0 %v1727
    %1992 = vmatpush1.bf16.msra.mxu0 %v1726
    %1993 = vmatprep.subr.bf16.mxu0 %v1729
    %1994 = vmatpush1.bf16.msra.mxu0 %v1728
    %1995 = vmatprep.subr.bf16.mxu0 %v1731
    %1996 = vmatpush1.bf16.msra.mxu0 %v1730
    %1997 = vmatprep.subr.bf16.mxu0 %v1733
    %1998 = vmatpush1.bf16.msra.mxu0 %v1732
    %1999 = vmatprep.subr.bf16.mxu0 %v1735
    %2000 = vmatpush1.bf16.msra.mxu0 %v1734
    %2001 = vmatprep.subr.bf16.mxu0 %v1737
    %2002 = vmatpush1.bf16.msra.mxu0 %v1736
    %2003 = vmatprep.subr.bf16.mxu0 %v1739
    %2004 = vmatpush1.bf16.msra.mxu0 %v1738
    %2005 = vmatprep.subr.bf16.mxu0 %v1741
    %2006 = vmatpush1.bf16.msra.mxu0 %v1740
    %2007 = vmatprep.subr.bf16.mxu0 %v1743
    %2008 = vmatpush1.bf16.msra.mxu0 %v1742
    %2009 = vmatprep.subr.bf16.mxu0 %v1745
    %2010 = vmatpush1.bf16.msra.mxu0 %v1744
    %2011 = vmatprep.mubr.bf16.mxu0 %v1153
    %2012 = vmatmul.mubr.bf16.gmra.mrb[0].mxu0 %v1152
    %v2013 = vpop.f32.mrb[0].mxu0
    %v2014 = vadd.f32 %v1973, %v2013
    %v2015 = vpop.f32.mrb[0].mxu0
    %v2016 = vadd.f32 %v1975, %v2015
    %v2017 = vpop.f32.mrb[0].mxu0
    %v2018 = vpop.f32.mrb[0].mxu0
    %2019 = vdwg.mxu0
    %2020 = vmatprep.subr.bf16.mxu0 %v1747
    %2021 = vmatpush1.bf16.msra.mxu0 %v1746
    %2022 = vmatprep.subr.bf16.mxu0 %v1749
    %2023 = vmatpush1.bf16.msra.mxu0 %v1748
    %2024 = vmatprep.subr.bf16.mxu0 %v1751
    %2025 = vmatpush1.bf16.msra.mxu0 %v1750
    %2026 = vmatprep.subr.bf16.mxu0 %v1753
    %2027 = vmatpush1.bf16.msra.mxu0 %v1752
    %2028 = vmatprep.subr.bf16.mxu0 %v1755
    %2029 = vmatpush1.bf16.msra.mxu0 %v1754
    %2030 = vmatprep.subr.bf16.mxu0 %v1757
    %2031 = vmatpush1.bf16.msra.mxu0 %v1756
    %2032 = vmatprep.subr.bf16.mxu0 %v1759
    %2033 = vmatpush1.bf16.msra.mxu0 %v1758
    %2034 = vmatprep.subr.bf16.mxu0 %v1761
    %2035 = vmatpush1.bf16.msra.mxu0 %v1760
    %2036 = vmatprep.subr.bf16.mxu0 %v1763
    %2037 = vmatpush1.bf16.msra.mxu0 %v1762
    %2038 = vmatprep.subr.bf16.mxu0 %v1765
    %2039 = vmatpush1.bf16.msra.mxu0 %v1764
    %2040 = vmatprep.subr.bf16.mxu0 %v1767
    %2041 = vmatpush1.bf16.msra.mxu0 %v1766
    %2042 = vmatprep.subr.bf16.mxu0 %v1769
    %2043 = vmatpush1.bf16.msra.mxu0 %v1768
    %2044 = vmatprep.subr.bf16.mxu0 %v1771
    %2045 = vmatpush1.bf16.msra.mxu0 %v1770
    %2046 = vmatprep.subr.bf16.mxu0 %v1773
    %2047 = vmatpush1.bf16.msra.mxu0 %v1772
    %2048 = vmatprep.subr.bf16.mxu0 %v1775
    %2049 = vmatpush1.bf16.msra.mxu0 %v1774
    %2050 = vmatprep.subr.bf16.mxu0 %v1777
    %2051 = vmatpush1.bf16.msra.mxu0 %v1776
    %2052 = vmatprep.mubr.bf16.mxu0 %v1155
    %2053 = vmatmul.mubr.bf16.gmra.mrb[0].mxu0 %v1154
    %v2054 = vpop.f32.mrb[0].mxu0
    %v2055 = vadd.f32 %v2014, %v2054
    %v2056 = vpop.f32.mrb[0].mxu0
    %v2057 = vadd.f32 %v2016, %v2056
    %v2058 = vpop.f32.mrb[0].mxu0
    %v2059 = vpop.f32.mrb[0].mxu0
    %2060 = vdwg.mxu0
    %2061 = vmatprep.subr.bf16.mxu0 %v1779
    %2062 = vmatpush1.bf16.msra.mxu0 %v1778
    %2063 = vmatprep.subr.bf16.mxu0 %v1781
    %2064 = vmatpush1.bf16.msra.mxu0 %v1780
    %2065 = vmatprep.subr.bf16.mxu0 %v1783
    %2066 = vmatpush1.bf16.msra.mxu0 %v1782
    %2067 = vmatprep.subr.bf16.mxu0 %v1785
    %2068 = vmatpush1.bf16.msra.mxu0 %v1784
    %2069 = vmatprep.subr.bf16.mxu0 %v1787
    %2070 = vmatpush1.bf16.msra.mxu0 %v1786
    %2071 = vmatprep.subr.bf16.mxu0 %v1789
    %2072 = vmatpush1.bf16.msra.mxu0 %v1788
    %2073 = vmatprep.subr.bf16.mxu0 %v1791
    %2074 = vmatpush1.bf16.msra.mxu0 %v1790
    %2075 = vmatprep.subr.bf16.mxu0 %v1793
    %2076 = vmatpush1.bf16.msra.mxu0 %v1792
    %2077 = vmatprep.subr.bf16.mxu0 %v1795
    %2078 = vmatpush1.bf16.msra.mxu0 %v1794
    %2079 = vmatprep.subr.bf16.mxu0 %v1797
    %2080 = vmatpush1.bf16.msra.mxu0 %v1796
    %2081 = vmatprep.subr.bf16.mxu0 %v1799
    %2082 = vmatpush1.bf16.msra.mxu0 %v1798
    %2083 = vmatprep.subr.bf16.mxu0 %v1801
    %2084 = vmatpush1.bf16.msra.mxu0 %v1800
    %2085 = vmatprep.subr.bf16.mxu0 %v1803
    %2086 = vmatpush1.bf16.msra.mxu0 %v1802
    %2087 = vmatprep.subr.bf16.mxu0 %v1805
    %2088 = vmatpush1.bf16.msra.mxu0 %v1804
    %2089 = vmatprep.subr.bf16.mxu0 %v1807
    %2090 = vmatpush1.bf16.msra.mxu0 %v1806
    %2091 = vmatprep.subr.bf16.mxu0 %v1809
    %2092 = vmatpush1.bf16.msra.mxu0 %v1808
    %2093 = vmatprep.mubr.bf16.mxu0 %v1157
    %2094 = vmatmul.mubr.bf16.gmra.mrb[0].mxu0 %v1156
    %v2095 = vpop.f32.mrb[0].mxu0
    %v2096 = vadd.f32 %v2055, %v2095
    %v2097 = vpop.f32.mrb[0].mxu0
    %v2098 = vadd.f32 %v2057, %v2097
    %v2099 = vpop.f32.mrb[0].mxu0
    %v2100 = vpop.f32.mrb[0].mxu0
    %2101 = vdwg.mxu0
    %v2102 = vmax.f32 %v2096, 0.0
    %v2103 = vmax.f32 %v2098, 0.0
    %v2104 = vpack.c.bf16 %v2102, %v2102
    %v2105 = vpack.c.bf16 %v2103, %v2103
    %v2106 = vld [vmem:[#allocation6] sm:$0xf]
    %v2107 = vld [vmem:[#allocation6 + $0x4] sm:$0xf]
    %v2108 = vld [vmem:[#allocation6 + $0x8] sm:$0xf]
    %v2109 = vld [vmem:[#allocation6 + $0xc] sm:$0xf]
    %v2110 = vld [vmem:[#allocation6 + $0x10] sm:$0xf]
    %v2111 = vld [vmem:[#allocation6 + $0x14] sm:$0xf]
    %v2112 = vld [vmem:[#allocation6 + $0x18] sm:$0xf]
    %v2113 = vld [vmem:[#allocation6 + $0x1c] sm:$0xf]
    %v2114 = vld [vmem:[#allocation6 + $0x20] sm:$0xf]
    %v2115 = vld [vmem:[#allocation6 + $0x24] sm:$0xf]
    %v2116 = vld [vmem:[#allocation6 + $0x28] sm:$0xf]
    %v2117 = vld [vmem:[#allocation6 + $0x2c] sm:$0xf]
    %v2118 = vld [vmem:[#allocation6 + $0x30] sm:$0xf]
    %v2119 = vld [vmem:[#allocation6 + $0x34] sm:$0xf]
    %v2120 = vld [vmem:[#allocation6 + $0x38] sm:$0xf]
    %v2121 = vld [vmem:[#allocation6 + $0x3c] sm:$0xf]
    %v2122 = vld [vmem:[#allocation6 + $0x40] sm:$0xf]
    %v2123 = vld [vmem:[#allocation6 + $0x44] sm:$0xf]
    %v2124 = vld [vmem:[#allocation6 + $0x48] sm:$0xf]
    %v2125 = vld [vmem:[#allocation6 + $0x4c] sm:$0xf]
    %v2126 = vld [vmem:[#allocation6 + $0x50] sm:$0xf]
    %v2127 = vld [vmem:[#allocation6 + $0x54] sm:$0xf]
    %v2128 = vld [vmem:[#allocation6 + $0x58] sm:$0xf]
    %v2129 = vld [vmem:[#allocation6 + $0x5c] sm:$0xf]
    %v2130 = vld [vmem:[#allocation6 + $0x60] sm:$0xf]
    %v2131 = vld [vmem:[#allocation6 + $0x64] sm:$0xf]
    %v2132 = vld [vmem:[#allocation6 + $0x68] sm:$0xf]
    %v2133 = vld [vmem:[#allocation6 + $0x6c] sm:$0xf]
    %v2134 = vld [vmem:[#allocation6 + $0x70] sm:$0xf]
    %v2135 = vld [vmem:[#allocation6 + $0x74] sm:$0xf]
    %v2136 = vld [vmem:[#allocation6 + $0x78] sm:$0xf]
    %v2137 = vld [vmem:[#allocation6 + $0x7c] sm:$0xf]
    %v2170 = vunpack.c.l.b16 %v2106
    %v2171 = vunpack.c.l.b16 %v2107
    %v2172 = vunpack.c.l.b16 %v2108
    %v2173 = vunpack.c.l.b16 %v2109
    %v2174 = vunpack.c.l.b16 %v2110
    %v2175 = vunpack.c.l.b16 %v2111
    %v2176 = vunpack.c.l.b16 %v2112
    %v2177 = vunpack.c.l.b16 %v2113
    %v2178 = vunpack.c.l.b16 %v2114
    %v2179 = vunpack.c.l.b16 %v2115
    %v2180 = vunpack.c.l.b16 %v2116
    %v2181 = vunpack.c.l.b16 %v2117
    %v2182 = vunpack.c.l.b16 %v2118
    %v2183 = vunpack.c.l.b16 %v2119
    %v2184 = vunpack.c.l.b16 %v2120
    %v2185 = vunpack.c.l.b16 %v2121
    %v2186 = vunpack.c.l.b16 %v2122
    %v2187 = vunpack.c.l.b16 %v2123
    %v2188 = vunpack.c.l.b16 %v2124
    %v2189 = vunpack.c.l.b16 %v2125
    %v2190 = vunpack.c.l.b16 %v2126
    %v2191 = vunpack.c.l.b16 %v2127
    %v2192 = vunpack.c.l.b16 %v2128
    %v2193 = vunpack.c.l.b16 %v2129
    %v2194 = vunpack.c.l.b16 %v2130
    %v2195 = vunpack.c.l.b16 %v2131
    %v2196 = vunpack.c.l.b16 %v2132
    %v2197 = vunpack.c.l.b16 %v2133
    %v2198 = vunpack.c.l.b16 %v2134
    %v2199 = vunpack.c.l.b16 %v2135
    %v2200 = vunpack.c.l.b16 %v2136
    %v2201 = vunpack.c.l.b16 %v2137
    %v2202 = vpack.c.b16 %v2171, %v2170
    %v2203 = vpack.c.b16 %v2173, %v2172
    %v2204 = vpack.c.b16 %v2175, %v2174
    %v2205 = vpack.c.b16 %v2177, %v2176
    %v2206 = vpack.c.b16 %v2179, %v2178
    %v2207 = vpack.c.b16 %v2181, %v2180
    %v2208 = vpack.c.b16 %v2183, %v2182
    %v2209 = vpack.c.b16 %v2185, %v2184
    %v2210 = vpack.c.b16 %v2187, %v2186
    %v2211 = vpack.c.b16 %v2189, %v2188
    %v2212 = vpack.c.b16 %v2191, %v2190
    %v2213 = vpack.c.b16 %v2193, %v2192
    %v2214 = vpack.c.b16 %v2195, %v2194
    %v2215 = vpack.c.b16 %v2197, %v2196
    %v2216 = vpack.c.b16 %v2199, %v2198
    %v2217 = vpack.c.b16 %v2201, %v2200
    %2234 = vmatprep.subr.bf16.mxu0 0
    %2235 = vmatpush1.bf16.msra.mxu0 %v2202
    %2236 = vmatprep.subr.bf16.mxu0 0
    %2237 = vmatpush1.bf16.msra.mxu0 %v2203
    %2238 = vmatprep.subr.bf16.mxu0 0
    %2239 = vmatpush1.bf16.msra.mxu0 %v2204
    %2240 = vmatprep.subr.bf16.mxu0 0
    %2241 = vmatpush1.bf16.msra.mxu0 %v2205
    %2242 = vmatprep.subr.bf16.mxu0 0
    %2243 = vmatpush1.bf16.msra.mxu0 %v2206
    %2244 = vmatprep.subr.bf16.mxu0 0
    %2245 = vmatpush1.bf16.msra.mxu0 %v2207
    %2246 = vmatprep.subr.bf16.mxu0 0
    %2247 = vmatpush1.bf16.msra.mxu0 %v2208
    %2248 = vmatprep.subr.bf16.mxu0 0
    %2249 = vmatpush1.bf16.msra.mxu0 %v2209
    %2250 = vmatprep.subr.bf16.mxu0 0
    %2251 = vmatpush1.bf16.msra.mxu0 %v2210
    %2252 = vmatprep.subr.bf16.mxu0 0
    %2253 = vmatpush1.bf16.msra.mxu0 %v2211
    %2254 = vmatprep.subr.bf16.mxu0 0
    %2255 = vmatpush1.bf16.msra.mxu0 %v2212
    %2256 = vmatprep.subr.bf16.mxu0 0
    %2257 = vmatpush1.bf16.msra.mxu0 %v2213
    %2258 = vmatprep.subr.bf16.mxu0 0
    %2259 = vmatpush1.bf16.msra.mxu0 %v2214
    %2260 = vmatprep.subr.bf16.mxu0 0
    %2261 = vmatpush1.bf16.msra.mxu0 %v2215
    %2262 = vmatprep.subr.bf16.mxu0 0
    %2263 = vmatpush1.bf16.msra.mxu0 %v2216
    %2264 = vmatprep.subr.bf16.mxu0 0
    %2265 = vmatpush1.bf16.msra.mxu0 %v2217
    %2266 = vmatprep.mubr.bf16.mxu0 %v2105
    %2267 = vmatmul.mubr.bf16.gmra.mrb[0].mxu0 %v2104
    %v2268 = vpop.f32.mrb[0].mxu0
    %v2269 = vadd.f32 0.0, %v2268
    %v2270 = vpop.f32.mrb[0].mxu0
    %v2271 = vpop.f32.mrb[0].mxu0
    %v2272 = vpop.f32.mrb[0].mxu0
    %2273 = vdwg.mxu0
    %v2274 = vld [vmem:[%s8] sm:$0x1]
    %v2276 = vlaneseq
    %v2277 = vshrl.u32 %v2276, 7
    %v2278 = vsub.s32 0, %v2277
    %v2279 = vrot.slane %v2274, %v2278
    %v2281 = vadd.f32 %v2269, %v2279
    %v2282 = vmax.f32 %v2281, 0.0
    %vm2283 = vcmask 31744
    %2284 = vst.msk [vmem:[%s9] sm:$0xff] %vm2283, %v2282
    // Predicated region
    $region50: #{easy_unet_generator.1} parent=1 // pred_check
      _
    $region51: #{easy_unet_generator.1} parent=1 // pred_check_branch
      %2286 = sbr.rel (0) target = $region53
    $region52: #{easy_unet_generator.1} parent=1 // pred_region
      _
    $region53: #{easy_unet_generator.1} parent=1 // pred_fallthru
      _
    // Predicated region
    $region54: #{easy_unet_generator.1} parent=1 // pred_check
      _
    $region55: #{easy_unet_generator.1} parent=1 // pred_check_branch
      %2288 = sbr.rel (0) target = $region57
    $region56: #{easy_unet_generator.1} parent=1 // pred_region
      _
    $region57: #{easy_unet_generator.1} parent=1 // pred_fallthru
      _
    %2289 = vsyncpa [#allocation3], 1
    %2290 = vsyncpa [#allocation5], 1

</llo_original>
